<compile_context>
chip_gen: v7x
topology: tpu7x:2x2x1
jax: 0.10.0
libtpu: 0.0.40
codegen_flags: <defaults>
</compile_context>

<pallas_src>
import functools

import jax
import jax.numpy as jnp
import numpy as np
from jax.experimental import pallas as pl
from jax.experimental.pallas import tpu as pltpu

NEG_SLOPE = 0.01   # nn.LeakyReLU default
BN_EPS = 1e-5      # nn.BatchNorm2d default
N_IMG = 2          # batch size baked into the fused kernel


# -----------------------------------------------------------------------------
# Host-built 0/1 selection matrices: (S @ act) is the FULL k=4,s=2,p=1 im2col
# of act, where act rows are (n, ih, iw) and lanes are channels.  Output rows
# are ordered (kh, kw, n, oh, ow); rows whose source pixel falls in the spatial
# zero padding are all-zero, which realizes the padding for free on the MXU.
# -----------------------------------------------------------------------------
def _make_im2col_sel(h_in, w_in, h_out, w_out):
    rows = 16 * N_IMG * h_out * w_out
    cols = N_IMG * h_in * w_in
    s = np.zeros((rows, cols), np.float32)
    for kh in range(4):
        for kw in range(4):
            for n in range(N_IMG):
                for oh in range(h_out):
                    for ow in range(w_out):
                        ih, iw = 2 * oh + kh - 1, 2 * ow + kw - 1
                        if 0 <= ih < h_in and 0 <= iw < w_in:
                            r = (((kh * 4 + kw) * N_IMG + n) * h_out + oh) * w_out + ow
                            s[r, (n * h_in + ih) * w_in + iw] = 1.0
    return s


_S2 = _make_im2col_sel(8, 8, 4, 4)   # (512, 128): a1 (2,8,8,32) -> conv2 patches
_S3 = _make_im2col_sel(4, 4, 2, 2)   # (128,  32): a2 (2,4,4,32) -> conv3 patches


# -----------------------------------------------------------------------------
# The fused kernel (all intermediates are values; no scratch refs).
# -----------------------------------------------------------------------------
def cnn_kernel(pb_ref, w_ref, s2_ref, o_ref):
    f32, bf16 = jnp.float32, jnp.bfloat16

    def leaky(v):
        return jnp.where(v > 0, v, NEG_SLOPE * v)

    def batchnorm(v, gamma, beta):
        # PyTorch train-mode BN: per-channel stats over rows (= N*H*W),
        # biased variance in the normalization.
        mean = jnp.mean(v, axis=0, keepdims=True)
        var = jnp.mean(jnp.square(v - mean), axis=0, keepdims=True)
        return (v - mean) * jax.lax.rsqrt(var + BN_EPS) * gamma + beta

    bgb = pb_ref[128:137, :]                                   # (9, 32) f32

    def conv_block(patches, w0, rows, lidx):
        # patches: (16*rows, 32) f32, row blocks ordered (kh, kw, n, oh, ow).
        # Per-kh accumulation: 4 independent K=128 dots; the 4 aligned 32-lane
        # blocks per kh are lane-concatenated in vregs (no VMEM staging).
        acc = jnp.zeros((rows, 32), f32)
        for kh in range(4):
            lhs = jnp.concatenate(
                [patches[(kh * 4 + kw) * rows:(kh * 4 + kw + 1) * rows, :]
                 for kw in range(4)], axis=-1).astype(bf16)    # (rows, 128)
            acc = acc + jnp.dot(
                lhs, w_ref[w0 + kh * 128:w0 + (kh + 1) * 128, :],
                preferred_element_type=f32)
        y = leaky(acc + bgb[3 * lidx:3 * lidx + 1, :])
        return batchnorm(y, bgb[3 * lidx + 1:3 * lidx + 2, :],
                         bgb[3 * lidx + 2:3 * lidx + 3, :])

    # ---------------- Layer 1: host-built patches, single K=32 MXU pass ------
    y = jnp.dot(pb_ref[0:128, :].astype(bf16), w_ref[0:32, :],
                preferred_element_type=f32)                    # (128, 32)
    y = leaky(y + bgb[0:1, :])
    a1 = batchnorm(y, bgb[1:2, :], bgb[2:3, :])                # (128, 32)

    # ---------------- Layer 2: in-kernel im2col (one selection dot) + conv ---
    g2 = jnp.dot(s2_ref[...], a1.astype(bf16),
                 preferred_element_type=f32)                   # (512, 32)
    a2 = conv_block(g2, w0=32, rows=32, lidx=1)                # (32, 32)

    # ---------------- Layer 3: selection matrix rides inside w_ref -----------
    g3 = jnp.dot(w_ref[1056:1184, :], a2.astype(bf16),
                 preferred_element_type=f32)                   # (128, 32)
    o_ref[...] = conv_block(g3, w0=544, rows=8, lidx=2)        # (8, 32)


# -----------------------------------------------------------------------------
# Host-side glue.
# -----------------------------------------------------------------------------
def _im2col_layer1(x_nchw):
    """k=4,s=2,p=1 patches for conv1; rows=(n,oh,ow), lanes=(kh,kw,cin)."""
    x = jnp.transpose(x_nchw, (0, 2, 3, 1))                    # NCHW -> NHWC
    n, h, w, c = x.shape
    x = jnp.pad(x, ((0, 0), (1, 1), (1, 1), (0, 0)))
    ho, wo = h // 2, w // 2
    cols = [x[:, kh:kh + 2 * ho:2, kw:kw + 2 * wo:2, :]
            for kh in range(4) for kw in range(4)]
    return jnp.concatenate(cols, axis=-1).reshape(n * ho * wo, 16 * c)  # (128,32)


def prepare_params(params):
    """One-time packing / bf16 cast (hoisted out of the per-call path)."""
    (w1, b1, g1, be1), (w2, b2, g2, be2), (w3, b3, g3, be3) = params
    # PyTorch (Cout, Cin, kh, kw) -> rows ordered (kh, kw, cin), cols = Cout.
    w1_2d = jnp.transpose(w1, (2, 3, 1, 0)).reshape(32, 32)
    w2_2d = jnp.transpose(w2, (2, 3, 1, 0)).reshape(512, 32)
    w3_2d = jnp.transpose(w3, (2, 3, 1, 0)).reshape(512, 32)
    wcat = jnp.concatenate(
        [w1_2d, w2_2d, w3_2d, jnp.asarray(_S3)], axis=0).astype(jnp.bfloat16)
    s2 = jnp.asarray(_S2, dtype=jnp.bfloat16)                  # (512, 128)
    bgb = jnp.stack([b1, g1, be1, b2, g2, be2, b3, g3, be3])   # (9, 32) f32
    return wcat, s2, bgb


@jax.jit
def cnn_forward(x_nchw, wcat, s2, bgb):
    # Layer-1 patches and the tiny f32 bias/gamma/beta table share one DMA.
    pb = jnp.concatenate([_im2col_layer1(x_nchw), bgb], axis=0)    # (137, 32)
    vmem = functools.partial(pl.BlockSpec, memory_space=pltpu.MemorySpace.VMEM)
    out = pl.pallas_call(
        cnn_kernel,
        out_shape=jax.ShapeDtypeStruct((8, 32), jnp.float32),
        in_specs=[vmem(), vmem(), vmem()],
        out_specs=vmem(),
    )(pb, wcat, s2)
    # rows = (n, oh, ow), lanes = channels  ->  NCHW
    return out.reshape(2, 2, 2, 32).transpose(0, 3, 1, 2)


def init_params(key):
    """Deterministic init matching 3 x [Conv2d(cin->32, k=4), BatchNorm2d(32)]."""
    params = []
    for cin in (2, 32, 32):
        cout = 32
        key, kw, kb = jax.random.split(key, 3)
        bound = float(cin * 4 * 4) ** -0.5
        w = jax.random.uniform(kw, (cout, cin, 4, 4), jnp.float32, -bound, bound)
        b = jax.random.uniform(kb, (cout,), jnp.float32, -bound, bound)
        gamma = jnp.ones((cout,), jnp.float32)     # BatchNorm2d weight init = 1
        beta = jnp.zeros((cout,), jnp.float32)     # BatchNorm2d bias init = 0
        params.append((w, b, gamma, beta))
    return params


if __name__ == "__main__":
    key = jax.random.PRNGKey(0)
    key, kx = jax.random.split(key)
    # NCHW input with 2 channels (first conv is Conv2d(2, 32, ...)).
    x = jax.random.normal(kx, (2, 2, 16, 16), jnp.float32)
    params = init_params(key)

    wcat, s2, bgb = prepare_params(params)      # one-time packing
    out = cnn_forward(x, wcat, s2, bgb)
    out = jax.block_until_ready(out)
    assert out.shape == (2, 32, 2, 2), out.shape
    assert out.dtype == jnp.float32
    print("KERNEL_OK")
</pallas_src>

<mosaic_0001>
module attributes {stable_mosaic.version = 11 : i64} {
  func.func @cnn_kernel(%arg0: memref<137x32xf32, #tpu.memory_space<vmem>>, %arg1: memref<1184x32xbf16, #tpu.memory_space<vmem>>, %arg2: memref<512x128xbf16, #tpu.memory_space<vmem>>, %arg3: memref<8x32xf32, #tpu.memory_space<vmem>>) attributes {dimension_semantics = [], scalar_prefetch = 0 : i64, scratch_operands = 0 : i64, tpu.core_type = #tpu.core_type<tc>} {
    %c128 = arith.constant 128 : index
    %c0 = arith.constant 0 : index
    %0 = vector.load %arg0[%c128, %c0] : memref<137x32xf32, #tpu.memory_space<vmem>>, vector<9x32xf32>
    %c0_0 = arith.constant 0 : index
    %c0_1 = arith.constant 0 : index
    %1 = vector.load %arg0[%c0_0, %c0_1] : memref<137x32xf32, #tpu.memory_space<vmem>>, vector<128x32xf32>
    %2 = arith.truncf %1 : vector<128x32xf32> to vector<128x32xbf16>
    %c0_2 = arith.constant 0 : index
    %c0_3 = arith.constant 0 : index
    %3 = vector.load %arg1[%c0_2, %c0_3] : memref<1184x32xbf16, #tpu.memory_space<vmem>>, vector<32x32xbf16>
    %cst = arith.constant dense<0.000000e+00> : vector<128x32xf32>
    %4 = tpu.matmul %2, %3, %cst {dimension_numbers = #tpu.dot_dimension_numbers<[1], [0], [0], [1], [0, 0, 1, 1], [], []>} : vector<128x32xbf16>, vector<32x32xbf16>, vector<128x32xf32> -> vector<128x32xf32>
    %5 = vector.extract_strided_slice %0 {offsets = [0, 0], sizes = [1, 32], strides = [1, 1]} : vector<9x32xf32> to vector<1x32xf32>
    %6 = vector.broadcast %5 : vector<1x32xf32> to vector<128x32xf32>
    %7 = arith.addf %4, %6 : vector<128x32xf32>
    %cst_4 = arith.constant 0.000000e+00 : f32
    %8 = vector.broadcast %cst_4 : f32 to vector<128x32xf32>
    %9 = arith.cmpf ogt, %7, %8 : vector<128x32xf32>
    %cst_5 = arith.constant 0.00999999977 : f32
    %10 = vector.broadcast %cst_5 : f32 to vector<128x32xf32>
    %11 = arith.mulf %10, %7 : vector<128x32xf32>
    %12 = arith.select %9, %7, %11 : vector<128x32xi1>, vector<128x32xf32>
    %13 = vector.extract_strided_slice %0 {offsets = [1, 0], sizes = [1, 32], strides = [1, 1]} : vector<9x32xf32> to vector<1x32xf32>
    %14 = vector.extract_strided_slice %0 {offsets = [2, 0], sizes = [1, 32], strides = [1, 1]} : vector<9x32xf32> to vector<1x32xf32>
    %cst_6 = arith.constant dense<0.000000e+00> : vector<32xf32>
    %15 = vector.multi_reduction <add>, %12, %cst_6 [0] : vector<128x32xf32> to vector<32xf32>
    %16 = vector.shape_cast %15 : vector<32xf32> to vector<1x32xf32>
    %cst_7 = arith.constant 1.280000e+02 : f32
    %17 = vector.broadcast %cst_7 : f32 to vector<1x32xf32>
    %18 = arith.divf %16, %17 : vector<1x32xf32>
    %19 = vector.broadcast %18 : vector<1x32xf32> to vector<128x32xf32>
    %20 = arith.subf %12, %19 : vector<128x32xf32>
    %21 = arith.mulf %20, %20 : vector<128x32xf32>
    %cst_8 = arith.constant dense<0.000000e+00> : vector<32xf32>
    %22 = vector.multi_reduction <add>, %21, %cst_8 [0] : vector<128x32xf32> to vector<32xf32>
    %23 = vector.shape_cast %22 : vector<32xf32> to vector<1x32xf32>
    %cst_9 = arith.constant 1.280000e+02 : f32
    %24 = vector.broadcast %cst_9 : f32 to vector<1x32xf32>
    %25 = arith.divf %23, %24 : vector<1x32xf32>
    %26 = vector.broadcast %18 : vector<1x32xf32> to vector<128x32xf32>
    %27 = arith.subf %12, %26 : vector<128x32xf32>
    %cst_10 = arith.constant 9.99999974E-6 : f32
    %28 = vector.broadcast %cst_10 : f32 to vector<1x32xf32>
    %29 = arith.addf %25, %28 : vector<1x32xf32>
    %30 = math.rsqrt %29 : vector<1x32xf32>
    %31 = vector.broadcast %30 : vector<1x32xf32> to vector<128x32xf32>
    %32 = arith.mulf %27, %31 : vector<128x32xf32>
    %33 = vector.broadcast %13 : vector<1x32xf32> to vector<128x32xf32>
    %34 = arith.mulf %32, %33 : vector<128x32xf32>
    %35 = vector.broadcast %14 : vector<1x32xf32> to vector<128x32xf32>
    %36 = arith.addf %34, %35 : vector<128x32xf32>
    %c0_11 = arith.constant 0 : index
    %c0_12 = arith.constant 0 : index
    %37 = vector.load %arg2[%c0_11, %c0_12] : memref<512x128xbf16, #tpu.memory_space<vmem>>, vector<512x128xbf16>
    %38 = arith.truncf %36 : vector<128x32xf32> to vector<128x32xbf16>
    %cst_13 = arith.constant dense<0.000000e+00> : vector<512x32xf32>
    %39 = tpu.matmul %37, %38, %cst_13 {dimension_numbers = #tpu.dot_dimension_numbers<[1], [0], [0], [1], [0, 0, 1, 1], [], []>} : vector<512x128xbf16>, vector<128x32xbf16>, vector<512x32xf32> -> vector<512x32xf32>
    %cst_14 = arith.constant 0.000000e+00 : f32
    %40 = vector.broadcast %cst_14 : f32 to vector<32x32xf32>
    %41 = vector.extract_strided_slice %39 {offsets = [0, 0], sizes = [32, 32], strides = [1, 1]} : vector<512x32xf32> to vector<32x32xf32>
    %42 = vector.extract_strided_slice %39 {offsets = [32, 0], sizes = [32, 32], strides = [1, 1]} : vector<512x32xf32> to vector<32x32xf32>
    %43 = vector.extract_strided_slice %39 {offsets = [64, 0], sizes = [32, 32], strides = [1, 1]} : vector<512x32xf32> to vector<32x32xf32>
    %44 = vector.extract_strided_slice %39 {offsets = [96, 0], sizes = [32, 32], strides = [1, 1]} : vector<512x32xf32> to vector<32x32xf32>
    %45 = tpu.concatenate %41, %42, %43, %44 in 1 : vector<32x32xf32>, vector<32x32xf32>, vector<32x32xf32>, vector<32x32xf32> -> vector<32x128xf32>
    %46 = arith.truncf %45 : vector<32x128xf32> to vector<32x128xbf16>
    %c32 = arith.constant 32 : index
    %c0_15 = arith.constant 0 : index
    %47 = vector.load %arg1[%c32, %c0_15] : memref<1184x32xbf16, #tpu.memory_space<vmem>>, vector<128x32xbf16>
    %cst_16 = arith.constant dense<0.000000e+00> : vector<32x32xf32>
    %48 = tpu.matmul %46, %47, %cst_16 {dimension_numbers = #tpu.dot_dimension_numbers<[1], [0], [0], [1], [0, 0, 1, 1], [], []>} : vector<32x128xbf16>, vector<128x32xbf16>, vector<32x32xf32> -> vector<32x32xf32>
    %49 = arith.addf %40, %48 : vector<32x32xf32>
    %50 = vector.extract_strided_slice %39 {offsets = [128, 0], sizes = [32, 32], strides = [1, 1]} : vector<512x32xf32> to vector<32x32xf32>
    %51 = vector.extract_strided_slice %39 {offsets = [160, 0], sizes = [32, 32], strides = [1, 1]} : vector<512x32xf32> to vector<32x32xf32>
    %52 = vector.extract_strided_slice %39 {offsets = [192, 0], sizes = [32, 32], strides = [1, 1]} : vector<512x32xf32> to vector<32x32xf32>
    %53 = vector.extract_strided_slice %39 {offsets = [224, 0], sizes = [32, 32], strides = [1, 1]} : vector<512x32xf32> to vector<32x32xf32>
    %54 = tpu.concatenate %50, %51, %52, %53 in 1 : vector<32x32xf32>, vector<32x32xf32>, vector<32x32xf32>, vector<32x32xf32> -> vector<32x128xf32>
    %55 = arith.truncf %54 : vector<32x128xf32> to vector<32x128xbf16>
    %c160 = arith.constant 160 : index
    %c0_17 = arith.constant 0 : index
    %56 = vector.load %arg1[%c160, %c0_17] : memref<1184x32xbf16, #tpu.memory_space<vmem>>, vector<128x32xbf16>
    %cst_18 = arith.constant dense<0.000000e+00> : vector<32x32xf32>
    %57 = tpu.matmul %55, %56, %cst_18 {dimension_numbers = #tpu.dot_dimension_numbers<[1], [0], [0], [1], [0, 0, 1, 1], [], []>} : vector<32x128xbf16>, vector<128x32xbf16>, vector<32x32xf32> -> vector<32x32xf32>
    %58 = arith.addf %49, %57 : vector<32x32xf32>
    %59 = vector.extract_strided_slice %39 {offsets = [256, 0], sizes = [32, 32], strides = [1, 1]} : vector<512x32xf32> to vector<32x32xf32>
    %60 = vector.extract_strided_slice %39 {offsets = [288, 0], sizes = [32, 32], strides = [1, 1]} : vector<512x32xf32> to vector<32x32xf32>
    %61 = vector.extract_strided_slice %39 {offsets = [320, 0], sizes = [32, 32], strides = [1, 1]} : vector<512x32xf32> to vector<32x32xf32>
    %62 = vector.extract_strided_slice %39 {offsets = [352, 0], sizes = [32, 32], strides = [1, 1]} : vector<512x32xf32> to vector<32x32xf32>
    %63 = tpu.concatenate %59, %60, %61, %62 in 1 : vector<32x32xf32>, vector<32x32xf32>, vector<32x32xf32>, vector<32x32xf32> -> vector<32x128xf32>
    %64 = arith.truncf %63 : vector<32x128xf32> to vector<32x128xbf16>
    %c288 = arith.constant 288 : index
    %c0_19 = arith.constant 0 : index
    %65 = vector.load %arg1[%c288, %c0_19] : memref<1184x32xbf16, #tpu.memory_space<vmem>>, vector<128x32xbf16>
    %cst_20 = arith.constant dense<0.000000e+00> : vector<32x32xf32>
    %66 = tpu.matmul %64, %65, %cst_20 {dimension_numbers = #tpu.dot_dimension_numbers<[1], [0], [0], [1], [0, 0, 1, 1], [], []>} : vector<32x128xbf16>, vector<128x32xbf16>, vector<32x32xf32> -> vector<32x32xf32>
    %67 = arith.addf %58, %66 : vector<32x32xf32>
    %68 = vector.extract_strided_slice %39 {offsets = [384, 0], sizes = [32, 32], strides = [1, 1]} : vector<512x32xf32> to vector<32x32xf32>
    %69 = vector.extract_strided_slice %39 {offsets = [416, 0], sizes = [32, 32], strides = [1, 1]} : vector<512x32xf32> to vector<32x32xf32>
    %70 = vector.extract_strided_slice %39 {offsets = [448, 0], sizes = [32, 32], strides = [1, 1]} : vector<512x32xf32> to vector<32x32xf32>
    %71 = vector.extract_strided_slice %39 {offsets = [480, 0], sizes = [32, 32], strides = [1, 1]} : vector<512x32xf32> to vector<32x32xf32>
    %72 = tpu.concatenate %68, %69, %70, %71 in 1 : vector<32x32xf32>, vector<32x32xf32>, vector<32x32xf32>, vector<32x32xf32> -> vector<32x128xf32>
    %73 = arith.truncf %72 : vector<32x128xf32> to vector<32x128xbf16>
    %c416 = arith.constant 416 : index
    %c0_21 = arith.constant 0 : index
    %74 = vector.load %arg1[%c416, %c0_21] : memref<1184x32xbf16, #tpu.memory_space<vmem>>, vector<128x32xbf16>
    %cst_22 = arith.constant dense<0.000000e+00> : vector<32x32xf32>
    %75 = tpu.matmul %73, %74, %cst_22 {dimension_numbers = #tpu.dot_dimension_numbers<[1], [0], [0], [1], [0, 0, 1, 1], [], []>} : vector<32x128xbf16>, vector<128x32xbf16>, vector<32x32xf32> -> vector<32x32xf32>
    %76 = arith.addf %67, %75 : vector<32x32xf32>
    %77 = vector.extract_strided_slice %0 {offsets = [3, 0], sizes = [1, 32], strides = [1, 1]} : vector<9x32xf32> to vector<1x32xf32>
    %78 = vector.broadcast %77 : vector<1x32xf32> to vector<32x32xf32>
    %79 = arith.addf %76, %78 : vector<32x32xf32>
    %cst_23 = arith.constant 0.000000e+00 : f32
    %80 = vector.broadcast %cst_23 : f32 to vector<32x32xf32>
    %81 = arith.cmpf ogt, %79, %80 : vector<32x32xf32>
    %cst_24 = arith.constant 0.00999999977 : f32
    %82 = vector.broadcast %cst_24 : f32 to vector<32x32xf32>
    %83 = arith.mulf %82, %79 : vector<32x32xf32>
    %84 = arith.select %81, %79, %83 : vector<32x32xi1>, vector<32x32xf32>
    %85 = vector.extract_strided_slice %0 {offsets = [4, 0], sizes = [1, 32], strides = [1, 1]} : vector<9x32xf32> to vector<1x32xf32>
    %86 = vector.extract_strided_slice %0 {offsets = [5, 0], sizes = [1, 32], strides = [1, 1]} : vector<9x32xf32> to vector<1x32xf32>
    %cst_25 = arith.constant dense<0.000000e+00> : vector<32xf32>
    %87 = vector.multi_reduction <add>, %84, %cst_25 [0] : vector<32x32xf32> to vector<32xf32>
    %88 = vector.shape_cast %87 : vector<32xf32> to vector<1x32xf32>
    %cst_26 = arith.constant 3.200000e+01 : f32
    %89 = vector.broadcast %cst_26 : f32 to vector<1x32xf32>
    %90 = arith.divf %88, %89 : vector<1x32xf32>
    %91 = vector.broadcast %90 : vector<1x32xf32> to vector<32x32xf32>
    %92 = arith.subf %84, %91 : vector<32x32xf32>
    %93 = arith.mulf %92, %92 : vector<32x32xf32>
    %cst_27 = arith.constant dense<0.000000e+00> : vector<32xf32>
    %94 = vector.multi_reduction <add>, %93, %cst_27 [0] : vector<32x32xf32> to vector<32xf32>
    %95 = vector.shape_cast %94 : vector<32xf32> to vector<1x32xf32>
    %cst_28 = arith.constant 3.200000e+01 : f32
    %96 = vector.broadcast %cst_28 : f32 to vector<1x32xf32>
    %97 = arith.divf %95, %96 : vector<1x32xf32>
    %98 = vector.broadcast %90 : vector<1x32xf32> to vector<32x32xf32>
    %99 = arith.subf %84, %98 : vector<32x32xf32>
    %cst_29 = arith.constant 9.99999974E-6 : f32
    %100 = vector.broadcast %cst_29 : f32 to vector<1x32xf32>
    %101 = arith.addf %97, %100 : vector<1x32xf32>
    %102 = math.rsqrt %101 : vector<1x32xf32>
    %103 = vector.broadcast %102 : vector<1x32xf32> to vector<32x32xf32>
    %104 = arith.mulf %99, %103 : vector<32x32xf32>
    %105 = vector.broadcast %85 : vector<1x32xf32> to vector<32x32xf32>
    %106 = arith.mulf %104, %105 : vector<32x32xf32>
    %107 = vector.broadcast %86 : vector<1x32xf32> to vector<32x32xf32>
    %108 = arith.addf %106, %107 : vector<32x32xf32>
    %c1056 = arith.constant 1056 : index
    %c0_30 = arith.constant 0 : index
    %109 = vector.load %arg1[%c1056, %c0_30] : memref<1184x32xbf16, #tpu.memory_space<vmem>>, vector<128x32xbf16>
    %110 = arith.truncf %108 : vector<32x32xf32> to vector<32x32xbf16>
    %cst_31 = arith.constant dense<0.000000e+00> : vector<128x32xf32>
    %111 = tpu.matmul %109, %110, %cst_31 {dimension_numbers = #tpu.dot_dimension_numbers<[1], [0], [0], [1], [0, 0, 1, 1], [], []>} : vector<128x32xbf16>, vector<32x32xbf16>, vector<128x32xf32> -> vector<128x32xf32>
    %cst_32 = arith.constant 0.000000e+00 : f32
    %112 = vector.broadcast %cst_32 : f32 to vector<8x32xf32>
    %113 = vector.extract_strided_slice %111 {offsets = [0, 0], sizes = [8, 32], strides = [1, 1]} : vector<128x32xf32> to vector<8x32xf32>
    %114 = vector.extract_strided_slice %111 {offsets = [8, 0], sizes = [8, 32], strides = [1, 1]} : vector<128x32xf32> to vector<8x32xf32>
    %115 = vector.extract_strided_slice %111 {offsets = [16, 0], sizes = [8, 32], strides = [1, 1]} : vector<128x32xf32> to vector<8x32xf32>
    %116 = vector.extract_strided_slice %111 {offsets = [24, 0], sizes = [8, 32], strides = [1, 1]} : vector<128x32xf32> to vector<8x32xf32>
    %117 = tpu.concatenate %113, %114, %115, %116 in 1 : vector<8x32xf32>, vector<8x32xf32>, vector<8x32xf32>, vector<8x32xf32> -> vector<8x128xf32>
    %118 = arith.truncf %117 : vector<8x128xf32> to vector<8x128xbf16>
    %c544 = arith.constant 544 : index
    %c0_33 = arith.constant 0 : index
    %119 = vector.load %arg1[%c544, %c0_33] : memref<1184x32xbf16, #tpu.memory_space<vmem>>, vector<128x32xbf16>
    %cst_34 = arith.constant dense<0.000000e+00> : vector<8x32xf32>
    %120 = tpu.matmul %118, %119, %cst_34 {dimension_numbers = #tpu.dot_dimension_numbers<[1], [0], [0], [1], [0, 0, 1, 1], [], []>} : vector<8x128xbf16>, vector<128x32xbf16>, vector<8x32xf32> -> vector<8x32xf32>
    %121 = arith.addf %112, %120 : vector<8x32xf32>
    %122 = vector.extract_strided_slice %111 {offsets = [32, 0], sizes = [8, 32], strides = [1, 1]} : vector<128x32xf32> to vector<8x32xf32>
    %123 = vector.extract_strided_slice %111 {offsets = [40, 0], sizes = [8, 32], strides = [1, 1]} : vector<128x32xf32> to vector<8x32xf32>
    %124 = vector.extract_strided_slice %111 {offsets = [48, 0], sizes = [8, 32], strides = [1, 1]} : vector<128x32xf32> to vector<8x32xf32>
    %125 = vector.extract_strided_slice %111 {offsets = [56, 0], sizes = [8, 32], strides = [1, 1]} : vector<128x32xf32> to vector<8x32xf32>
    %126 = tpu.concatenate %122, %123, %124, %125 in 1 : vector<8x32xf32>, vector<8x32xf32>, vector<8x32xf32>, vector<8x32xf32> -> vector<8x128xf32>
    %127 = arith.truncf %126 : vector<8x128xf32> to vector<8x128xbf16>
    %c672 = arith.constant 672 : index
    %c0_35 = arith.constant 0 : index
    %128 = vector.load %arg1[%c672, %c0_35] : memref<1184x32xbf16, #tpu.memory_space<vmem>>, vector<128x32xbf16>
    %cst_36 = arith.constant dense<0.000000e+00> : vector<8x32xf32>
    %129 = tpu.matmul %127, %128, %cst_36 {dimension_numbers = #tpu.dot_dimension_numbers<[1], [0], [0], [1], [0, 0, 1, 1], [], []>} : vector<8x128xbf16>, vector<128x32xbf16>, vector<8x32xf32> -> vector<8x32xf32>
    %130 = arith.addf %121, %129 : vector<8x32xf32>
    %131 = vector.extract_strided_slice %111 {offsets = [64, 0], sizes = [8, 32], strides = [1, 1]} : vector<128x32xf32> to vector<8x32xf32>
    %132 = vector.extract_strided_slice %111 {offsets = [72, 0], sizes = [8, 32], strides = [1, 1]} : vector<128x32xf32> to vector<8x32xf32>
    %133 = vector.extract_strided_slice %111 {offsets = [80, 0], sizes = [8, 32], strides = [1, 1]} : vector<128x32xf32> to vector<8x32xf32>
    %134 = vector.extract_strided_slice %111 {offsets = [88, 0], sizes = [8, 32], strides = [1, 1]} : vector<128x32xf32> to vector<8x32xf32>
    %135 = tpu.concatenate %131, %132, %133, %134 in 1 : vector<8x32xf32>, vector<8x32xf32>, vector<8x32xf32>, vector<8x32xf32> -> vector<8x128xf32>
    %136 = arith.truncf %135 : vector<8x128xf32> to vector<8x128xbf16>
    %c800 = arith.constant 800 : index
    %c0_37 = arith.constant 0 : index
    %137 = vector.load %arg1[%c800, %c0_37] : memref<1184x32xbf16, #tpu.memory_space<vmem>>, vector<128x32xbf16>
    %cst_38 = arith.constant dense<0.000000e+00> : vector<8x32xf32>
    %138 = tpu.matmul %136, %137, %cst_38 {dimension_numbers = #tpu.dot_dimension_numbers<[1], [0], [0], [1], [0, 0, 1, 1], [], []>} : vector<8x128xbf16>, vector<128x32xbf16>, vector<8x32xf32> -> vector<8x32xf32>
    %139 = arith.addf %130, %138 : vector<8x32xf32>
    %140 = vector.extract_strided_slice %111 {offsets = [96, 0], sizes = [8, 32], strides = [1, 1]} : vector<128x32xf32> to vector<8x32xf32>
    %141 = vector.extract_strided_slice %111 {offsets = [104, 0], sizes = [8, 32], strides = [1, 1]} : vector<128x32xf32> to vector<8x32xf32>
    %142 = vector.extract_strided_slice %111 {offsets = [112, 0], sizes = [8, 32], strides = [1, 1]} : vector<128x32xf32> to vector<8x32xf32>
    %143 = vector.extract_strided_slice %111 {offsets = [120, 0], sizes = [8, 32], strides = [1, 1]} : vector<128x32xf32> to vector<8x32xf32>
    %144 = tpu.concatenate %140, %141, %142, %143 in 1 : vector<8x32xf32>, vector<8x32xf32>, vector<8x32xf32>, vector<8x32xf32> -> vector<8x128xf32>
    %145 = arith.truncf %144 : vector<8x128xf32> to vector<8x128xbf16>
    %c928 = arith.constant 928 : index
    %c0_39 = arith.constant 0 : index
    %146 = vector.load %arg1[%c928, %c0_39] : memref<1184x32xbf16, #tpu.memory_space<vmem>>, vector<128x32xbf16>
    %cst_40 = arith.constant dense<0.000000e+00> : vector<8x32xf32>
    %147 = tpu.matmul %145, %146, %cst_40 {dimension_numbers = #tpu.dot_dimension_numbers<[1], [0], [0], [1], [0, 0, 1, 1], [], []>} : vector<8x128xbf16>, vector<128x32xbf16>, vector<8x32xf32> -> vector<8x32xf32>
    %148 = arith.addf %139, %147 : vector<8x32xf32>
    %149 = vector.extract_strided_slice %0 {offsets = [6, 0], sizes = [1, 32], strides = [1, 1]} : vector<9x32xf32> to vector<1x32xf32>
    %150 = vector.broadcast %149 : vector<1x32xf32> to vector<8x32xf32>
    %151 = arith.addf %148, %150 : vector<8x32xf32>
    %cst_41 = arith.constant 0.000000e+00 : f32
    %152 = vector.broadcast %cst_41 : f32 to vector<8x32xf32>
    %153 = arith.cmpf ogt, %151, %152 : vector<8x32xf32>
    %cst_42 = arith.constant 0.00999999977 : f32
    %154 = vector.broadcast %cst_42 : f32 to vector<8x32xf32>
    %155 = arith.mulf %154, %151 : vector<8x32xf32>
    %156 = arith.select %153, %151, %155 : vector<8x32xi1>, vector<8x32xf32>
    %157 = vector.extract_strided_slice %0 {offsets = [7, 0], sizes = [1, 32], strides = [1, 1]} : vector<9x32xf32> to vector<1x32xf32>
    %158 = vector.extract_strided_slice %0 {offsets = [8, 0], sizes = [1, 32], strides = [1, 1]} : vector<9x32xf32> to vector<1x32xf32>
    %cst_43 = arith.constant dense<0.000000e+00> : vector<32xf32>
    %159 = vector.multi_reduction <add>, %156, %cst_43 [0] : vector<8x32xf32> to vector<32xf32>
    %160 = vector.shape_cast %159 : vector<32xf32> to vector<1x32xf32>
    %cst_44 = arith.constant 8.000000e+00 : f32
    %161 = vector.broadcast %cst_44 : f32 to vector<1x32xf32>
    %162 = arith.divf %160, %161 : vector<1x32xf32>
    %163 = vector.broadcast %162 : vector<1x32xf32> to vector<8x32xf32>
    %164 = arith.subf %156, %163 : vector<8x32xf32>
    %165 = arith.mulf %164, %164 : vector<8x32xf32>
    %cst_45 = arith.constant dense<0.000000e+00> : vector<32xf32>
    %166 = vector.multi_reduction <add>, %165, %cst_45 [0] : vector<8x32xf32> to vector<32xf32>
    %167 = vector.shape_cast %166 : vector<32xf32> to vector<1x32xf32>
    %cst_46 = arith.constant 8.000000e+00 : f32
    %168 = vector.broadcast %cst_46 : f32 to vector<1x32xf32>
    %169 = arith.divf %167, %168 : vector<1x32xf32>
    %170 = vector.broadcast %162 : vector<1x32xf32> to vector<8x32xf32>
    %171 = arith.subf %156, %170 : vector<8x32xf32>
    %cst_47 = arith.constant 9.99999974E-6 : f32
    %172 = vector.broadcast %cst_47 : f32 to vector<1x32xf32>
    %173 = arith.addf %169, %172 : vector<1x32xf32>
    %174 = math.rsqrt %173 : vector<1x32xf32>
    %175 = vector.broadcast %174 : vector<1x32xf32> to vector<8x32xf32>
    %176 = arith.mulf %171, %175 : vector<8x32xf32>
    %177 = vector.broadcast %157 : vector<1x32xf32> to vector<8x32xf32>
    %178 = arith.mulf %176, %177 : vector<8x32xf32>
    %179 = vector.broadcast %158 : vector<1x32xf32> to vector<8x32xf32>
    %180 = arith.addf %178, %179 : vector<8x32xf32>
    %c0_48 = arith.constant 0 : index
    %c0_49 = arith.constant 0 : index
    %181 = vector.load %arg3[%c0_48, %c0_49] : memref<8x32xf32, #tpu.memory_space<vmem>>, vector<8x32xf32>
    tpu.vector_store %arg3[%c0_48, %c0_49], %180 {strides = array<i32>} : memref<8x32xf32, #tpu.memory_space<vmem>>, vector<8x32xf32>,
    return
  }
}

</mosaic_0001>

<llo_original>
// kernel: cnn_forward.1
$region0: #{cnn_forward.1}
  #allocation0 [shape = 'u32[]', space=smem, size = 0x4, offset = 0x4, fixed_abs, tag = 'smem constant byte address 0x4 - core index']
  #allocation1 [shape = 'u32[144,128]{1,0:T(1,128)}', space=vmem, size = 0x12000, scoped, tag = 'internal scratch']
  %s0 = inlined_call_operand.vmem [shape: f32[137,32], index: 0, kind: input, shape index: {}]
  %s1 = inlined_call_operand.vmem [shape: bf16[1184,32], index: 1, kind: input, shape index: {}]
  %s2 = inlined_call_operand.vmem [shape: bf16[512,128], index: 2, kind: input, shape index: {}]
  %s3 = inlined_call_operand.hbm [shape: f32[8,32], index: 3, kind: output, shape index: {}]
  %s4 = sld [smem:[#allocation0]]
  $region22: #{cnn_forward.1} parent=0
    _
  %s6 = ssub.s32 1, %s4
  %s7 = scalar_select 0, %s6, %s4
  $region1: #{cnn_forward.1} parent=0
    #allocation2 [shape = 'u8[4096]{0}', space=vmem, size = 0x1000, scoped, tag = 'output window, operand 0, single buffered']
    #allocation3 [shape = 's32[1]{0}', space=sflag, size = 0x4, scoped, tag = 'scoped memory for cnn_forward.1']
    %8 = vsyncpa [#allocation3], 0
    // Predicated region
    $region2: #{cnn_forward.1} parent=1 // pred_check
      _
    $region3: #{cnn_forward.1} parent=1 // pred_check_branch
      %10 = sbr.rel (0) target = $region5
    $region4: #{cnn_forward.1} parent=1 // pred_region
      _
    $region5: #{cnn_forward.1} parent=1 // pred_fallthru
      _
    // Predicated region
    $region6: #{cnn_forward.1} parent=1 // pred_check
      _
    $region7: #{cnn_forward.1} parent=1 // pred_check_branch
      %12 = sbr.rel (0) target = $region9
    $region8: #{cnn_forward.1} parent=1 // pred_region
      _
    $region9: #{cnn_forward.1} parent=1 // pred_fallthru
      _
    // Predicated region
    $region10: #{cnn_forward.1} parent=1 // pred_check
      _
    $region11: #{cnn_forward.1} parent=1 // pred_check_branch
      %14 = sbr.rel (0) target = $region13
    $region12: #{cnn_forward.1} parent=1 // pred_region
      _
    $region13: #{cnn_forward.1} parent=1 // pred_fallthru
      _
    %v16 = vld [vmem:[%s0 + $0x80] sm:$0xff]
    %v17 = vld [vmem:[%s0 + $0x88] sm:$0x1]
    %v18 = vld [vmem:[%s0] sm:$0xff]
    %v19 = vld [vmem:[%s0 + $0x8] sm:$0xff]
    %v20 = vld [vmem:[%s0 + $0x10] sm:$0xff]
    %v21 = vld [vmem:[%s0 + $0x18] sm:$0xff]
    %v22 = vld [vmem:[%s0 + $0x20] sm:$0xff]
    %v23 = vld [vmem:[%s0 + $0x28] sm:$0xff]
    %v24 = vld [vmem:[%s0 + $0x30] sm:$0xff]
    %v25 = vld [vmem:[%s0 + $0x38] sm:$0xff]
    %v26 = vld [vmem:[%s0 + $0x40] sm:$0xff]
    %v27 = vld [vmem:[%s0 + $0x48] sm:$0xff]
    %v28 = vld [vmem:[%s0 + $0x50] sm:$0xff]
    %v29 = vld [vmem:[%s0 + $0x58] sm:$0xff]
    %v30 = vld [vmem:[%s0 + $0x60] sm:$0xff]
    %v31 = vld [vmem:[%s0 + $0x68] sm:$0xff]
    %v32 = vld [vmem:[%s0 + $0x70] sm:$0xff]
    %v33 = vld [vmem:[%s0 + $0x78] sm:$0xff]
    %v34 = vpack.c.bf16 %v19, %v18
    %v35 = vpack.c.bf16 %v21, %v20
    %v36 = vpack.c.bf16 %v23, %v22
    %v37 = vpack.c.bf16 %v25, %v24
    %v38 = vpack.c.bf16 %v27, %v26
    %v39 = vpack.c.bf16 %v29, %v28
    %v40 = vpack.c.bf16 %v31, %v30
    %v41 = vpack.c.bf16 %v33, %v32
    %v42 = vld [vmem:[%s1] sm:$0xf]
    %v43 = vld [vmem:[%s1 + $0x4] sm:$0xf]
    %v44 = vld [vmem:[%s1 + $0x8] sm:$0xf]
    %v45 = vld [vmem:[%s1 + $0xc] sm:$0xf]
    %v46 = vlaneseq
    %v47 = vshrl.u32 %v46, 7
    %v48 = vsub.s32 0, %v47
    %v49 = vrot.slane %v16, %v48
    %v54 = vunpack.c.l.b16 %v42
    %v55 = vunpack.c.l.b16 %v43
    %v56 = vunpack.c.l.b16 %v44
    %v57 = vunpack.c.l.b16 %v45
    %v58 = vpack.c.b16 %v55, %v54
    %v59 = vpack.c.b16 %v57, %v56
    %vm62 = vcmask 261120
    %v64 = vsel %vm62, %v34, 0
    %v67 = vsel %vm62, %v35, 0
    %v70 = vsel %vm62, %v36, 0
    %v73 = vsel %vm62, %v37, 0
    %v76 = vsel %vm62, %v38, 0
    %v79 = vsel %vm62, %v39, 0
    %v82 = vsel %vm62, %v40, 0
    %v85 = vsel %vm62, %v41, 0
    %87 = vmatprep.subr.bf16.mxu0 0
    %88 = vmatpush1.bf16.msra.mxu0 %v58
    %89 = vmatprep.subr.bf16.mxu0 0
    %90 = vmatpush1.bf16.msra.mxu0 %v59
    %91 = vmatprep.subr.bf16.mxu0 0
    %92 = vmatpush1.bf16.msra.mxu0 0
    %93 = vmatprep.subr.bf16.mxu0 0
    %94 = vmatpush1.bf16.msra.mxu0 0
    %95 = vmatprep.subr.bf16.mxu0 0
    %96 = vmatpush1.bf16.msra.mxu0 0
    %97 = vmatprep.subr.bf16.mxu0 0
    %98 = vmatpush1.bf16.msra.mxu0 0
    %99 = vmatprep.subr.bf16.mxu0 0
    %100 = vmatpush1.bf16.msra.mxu0 0
    %101 = vmatprep.subr.bf16.mxu0 0
    %102 = vmatpush1.bf16.msra.mxu0 0
    %103 = vmatprep.subr.bf16.mxu0 0
    %104 = vmatpush1.bf16.msra.mxu0 0
    %105 = vmatprep.subr.bf16.mxu0 0
    %106 = vmatpush1.bf16.msra.mxu0 0
    %107 = vmatprep.subr.bf16.mxu0 0
    %108 = vmatpush1.bf16.msra.mxu0 0
    %109 = vmatprep.subr.bf16.mxu0 0
    %110 = vmatpush1.bf16.msra.mxu0 0
    %111 = vmatprep.subr.bf16.mxu0 0
    %112 = vmatpush1.bf16.msra.mxu0 0
    %113 = vmatprep.subr.bf16.mxu0 0
    %114 = vmatpush1.bf16.msra.mxu0 0
    %115 = vmatprep.subr.bf16.mxu0 0
    %116 = vmatpush1.bf16.msra.mxu0 0
    %117 = vmatprep.subr.bf16.mxu0 0
    %118 = vmatpush1.bf16.msra.mxu0 0
    %119 = vmatprep.mubr.bf16.mxu0 0
    %120 = vmatmul.mubr.bf16.gmra.mrb[0].mxu0 %v64
    %v121 = vpop.f32.mrb[0].mxu0
    %v122 = vadd.f32 %v49, %v121
    %v123 = vpop.f32.mrb[0].mxu0
    %v124 = vpop.f32.mrb[0].mxu0
    %v125 = vadd.f32 %v49, %v124
    %v126 = vpop.f32.mrb[0].mxu0
    %127 = vmatprep.mubr.bf16.mxu0 0
    %128 = vmatmul.mubr.bf16.gmra.mrb[0].mxu0 %v67
    %v129 = vpop.f32.mrb[0].mxu0
    %v130 = vadd.f32 %v49, %v129
    %v131 = vpop.f32.mrb[0].mxu0
    %v132 = vpop.f32.mrb[0].mxu0
    %v133 = vadd.f32 %v49, %v132
    %v134 = vpop.f32.mrb[0].mxu0
    %135 = vmatprep.mubr.bf16.mxu0 0
    %136 = vmatmul.mubr.bf16.gmra.mrb[0].mxu0 %v70
    %v137 = vpop.f32.mrb[0].mxu0
    %v138 = vadd.f32 %v49, %v137
    %v139 = vpop.f32.mrb[0].mxu0
    %v140 = vpop.f32.mrb[0].mxu0
    %v141 = vadd.f32 %v49, %v140
    %v142 = vpop.f32.mrb[0].mxu0
    %143 = vmatprep.mubr.bf16.mxu0 0
    %144 = vmatmul.mubr.bf16.gmra.mrb[0].mxu0 %v73
    %v145 = vpop.f32.mrb[0].mxu0
    %v146 = vadd.f32 %v49, %v145
    %v147 = vpop.f32.mrb[0].mxu0
    %v148 = vpop.f32.mrb[0].mxu0
    %v149 = vadd.f32 %v49, %v148
    %v150 = vpop.f32.mrb[0].mxu0
    %151 = vmatprep.mubr.bf16.mxu0 0
    %152 = vmatmul.mubr.bf16.gmra.mrb[0].mxu0 %v76
    %v153 = vpop.f32.mrb[0].mxu0
    %v154 = vadd.f32 %v49, %v153
    %v155 = vpop.f32.mrb[0].mxu0
    %v156 = vpop.f32.mrb[0].mxu0
    %v157 = vadd.f32 %v49, %v156
    %v158 = vpop.f32.mrb[0].mxu0
    %159 = vmatprep.mubr.bf16.mxu0 0
    %160 = vmatmul.mubr.bf16.gmra.mrb[0].mxu0 %v79
    %v161 = vpop.f32.mrb[0].mxu0
    %v162 = vadd.f32 %v49, %v161
    %v163 = vpop.f32.mrb[0].mxu0
    %v164 = vpop.f32.mrb[0].mxu0
    %v165 = vadd.f32 %v49, %v164
    %v166 = vpop.f32.mrb[0].mxu0
    %167 = vmatprep.mubr.bf16.mxu0 0
    %168 = vmatmul.mubr.bf16.gmra.mrb[0].mxu0 %v82
    %v169 = vpop.f32.mrb[0].mxu0
    %v170 = vadd.f32 %v49, %v169
    %v171 = vpop.f32.mrb[0].mxu0
    %v172 = vpop.f32.mrb[0].mxu0
    %v173 = vadd.f32 %v49, %v172
    %v174 = vpop.f32.mrb[0].mxu0
    %175 = vmatprep.mubr.bf16.mxu0 0
    %176 = vmatmul.mubr.bf16.gmra.mrb[0].mxu0 %v85
    %v177 = vpop.f32.mrb[0].mxu0
    %v178 = vadd.f32 %v49, %v177
    %v179 = vpop.f32.mrb[0].mxu0
    %v180 = vpop.f32.mrb[0].mxu0
    %v181 = vadd.f32 %v49, %v180
    %v182 = vpop.f32.mrb[0].mxu0
    %183 = vdwg.mxu0
    %vm184 = vcmp.gt.f32.partialorder %v122, 0.0
    %vm185 = vcmp.gt.f32.partialorder %v125, 0.0
    %vm186 = vcmp.gt.f32.partialorder %v130, 0.0
    %vm187 = vcmp.gt.f32.partialorder %v133, 0.0
    %vm188 = vcmp.gt.f32.partialorder %v138, 0.0
    %vm189 = vcmp.gt.f32.partialorder %v141, 0.0
    %vm190 = vcmp.gt.f32.partialorder %v146, 0.0
    %vm191 = vcmp.gt.f32.partialorder %v149, 0.0
    %vm192 = vcmp.gt.f32.partialorder %v154, 0.0
    %vm193 = vcmp.gt.f32.partialorder %v157, 0.0
    %vm194 = vcmp.gt.f32.partialorder %v162, 0.0
    %vm195 = vcmp.gt.f32.partialorder %v165, 0.0
    %vm196 = vcmp.gt.f32.partialorder %v170, 0.0
    %vm197 = vcmp.gt.f32.partialorder %v173, 0.0
    %vm198 = vcmp.gt.f32.partialorder %v178, 0.0
    %vm199 = vcmp.gt.f32.partialorder %v181, 0.0
    %v200 = vmul.f32 %v122, 0.01
    %v201 = vmul.f32 %v125, 0.01
    %v202 = vmul.f32 %v130, 0.01
    %v203 = vmul.f32 %v133, 0.01
    %v204 = vmul.f32 %v138, 0.01
    %v205 = vmul.f32 %v141, 0.01
    %v206 = vmul.f32 %v146, 0.01
    %v207 = vmul.f32 %v149, 0.01
    %v208 = vmul.f32 %v154, 0.01
    %v209 = vmul.f32 %v157, 0.01
    %v210 = vmul.f32 %v162, 0.01
    %v211 = vmul.f32 %v165, 0.01
    %v212 = vmul.f32 %v170, 0.01
    %v213 = vmul.f32 %v173, 0.01
    %v214 = vmul.f32 %v178, 0.01
    %v215 = vmul.f32 %v181, 0.01
    %v216 = vsel %vm184, %v122, %v200
    %v217 = vsel %vm185, %v125, %v201
    %v218 = vsel %vm186, %v130, %v202
    %v219 = vsel %vm187, %v133, %v203
    %v220 = vsel %vm188, %v138, %v204
    %v221 = vsel %vm189, %v141, %v205
    %v222 = vsel %vm190, %v146, %v206
    %v223 = vsel %vm191, %v149, %v207
    %v224 = vsel %vm192, %v154, %v208
    %v225 = vsel %vm193, %v157, %v209
    %v226 = vsel %vm194, %v162, %v210
    %v227 = vsel %vm195, %v165, %v211
    %v228 = vsel %vm196, %v170, %v212
    %v229 = vsel %vm197, %v173, %v213
    %v230 = vsel %vm198, %v178, %v214
    %v231 = vsel %vm199, %v181, %v215
    %v232 = vsel %vm62, %v216, 0.0
    %v233 = vsel %vm62, %v217, 0.0
    %v234 = vadd.f32 %v232, %v233
    %v235 = vsel %vm62, %v218, 0.0
    %v236 = vadd.f32 %v234, %v235
    %v237 = vsel %vm62, %v219, 0.0
    %v238 = vadd.f32 %v236, %v237
    %v239 = vsel %vm62, %v220, 0.0
    %v240 = vadd.f32 %v238, %v239
    %v241 = vsel %vm62, %v221, 0.0
    %v242 = vadd.f32 %v240, %v241
    %v243 = vsel %vm62, %v222, 0.0
    %v244 = vadd.f32 %v242, %v243
    %v245 = vsel %vm62, %v223, 0.0
    %v246 = vadd.f32 %v244, %v245
    %v247 = vsel %vm62, %v224, 0.0
    %v248 = vadd.f32 %v246, %v247
    %v249 = vsel %vm62, %v225, 0.0
    %v250 = vadd.f32 %v248, %v249
    %v251 = vsel %vm62, %v226, 0.0
    %v252 = vadd.f32 %v250, %v251
    %v253 = vsel %vm62, %v227, 0.0
    %v254 = vadd.f32 %v252, %v253
    %v255 = vsel %vm62, %v228, 0.0
    %v256 = vadd.f32 %v254, %v255
    %v257 = vsel %vm62, %v229, 0.0
    %v258 = vadd.f32 %v256, %v257
    %v259 = vsel %vm62, %v230, 0.0
    %v260 = vadd.f32 %v258, %v259
    %v261 = vsel %vm62, %v231, 0.0
    %v262 = vadd.f32 %v260, %v261
    %v263 = vrot.slane %v262, 4
    %v264 = vadd.f32 %v262, %v263
    %v265 = vrot.slane %v264, 2
    %v266 = vadd.f32 %v264, %v265
    %v267 = vrot.slane %v266, 1
    %v268 = vadd.f32 %v266, %v267
    %v269 = vrcp.pop 128.0
    %v270 = vmul.f32 %v268, %v269
    %v271 = vsub.f32 %v216, %v270
    %v272 = vsub.f32 %v217, %v270
    %v273 = vsub.f32 %v218, %v270
    %v274 = vsub.f32 %v219, %v270
    %v275 = vsub.f32 %v220, %v270
    %v276 = vsub.f32 %v221, %v270
    %v277 = vsub.f32 %v222, %v270
    %v278 = vsub.f32 %v223, %v270
    %v279 = vsub.f32 %v224, %v270
    %v280 = vsub.f32 %v225, %v270
    %v281 = vsub.f32 %v226, %v270
    %v282 = vsub.f32 %v227, %v270
    %v283 = vsub.f32 %v228, %v270
    %v284 = vsub.f32 %v229, %v270
    %v285 = vsub.f32 %v230, %v270
    %v286 = vsub.f32 %v231, %v270
    %v287 = vmul.f32 %v271, %v271
    %v288 = vmul.f32 %v272, %v272
    %v289 = vmul.f32 %v273, %v273
    %v290 = vmul.f32 %v274, %v274
    %v291 = vmul.f32 %v275, %v275
    %v292 = vmul.f32 %v276, %v276
    %v293 = vmul.f32 %v277, %v277
    %v294 = vmul.f32 %v278, %v278
    %v295 = vmul.f32 %v279, %v279
    %v296 = vmul.f32 %v280, %v280
    %v297 = vmul.f32 %v281, %v281
    %v298 = vmul.f32 %v282, %v282
    %v299 = vmul.f32 %v283, %v283
    %v300 = vmul.f32 %v284, %v284
    %v301 = vmul.f32 %v285, %v285
    %v302 = vmul.f32 %v286, %v286
    %v303 = vsel %vm62, %v287, 0.0
    %v304 = vsel %vm62, %v288, 0.0
    %v305 = vadd.f32 %v303, %v304
    %v306 = vsel %vm62, %v289, 0.0
    %v307 = vadd.f32 %v305, %v306
    %v308 = vsel %vm62, %v290, 0.0
    %v309 = vadd.f32 %v307, %v308
    %v310 = vsel %vm62, %v291, 0.0
    %v311 = vadd.f32 %v309, %v310
    %v312 = vsel %vm62, %v292, 0.0
    %v313 = vadd.f32 %v311, %v312
    %v314 = vsel %vm62, %v293, 0.0
    %v315 = vadd.f32 %v313, %v314
    %v316 = vsel %vm62, %v294, 0.0
    %v317 = vadd.f32 %v315, %v316
    %v318 = vsel %vm62, %v295, 0.0
    %v319 = vadd.f32 %v317, %v318
    %v320 = vsel %vm62, %v296, 0.0
    %v321 = vadd.f32 %v319, %v320
    %v322 = vsel %vm62, %v297, 0.0
    %v323 = vadd.f32 %v321, %v322
    %v324 = vsel %vm62, %v298, 0.0
    %v325 = vadd.f32 %v323, %v324
    %v326 = vsel %vm62, %v299, 0.0
    %v327 = vadd.f32 %v325, %v326
    %v328 = vsel %vm62, %v300, 0.0
    %v329 = vadd.f32 %v327, %v328
    %v330 = vsel %vm62, %v301, 0.0
    %v331 = vadd.f32 %v329, %v330
    %v332 = vsel %vm62, %v302, 0.0
    %v333 = vadd.f32 %v331, %v332
    %v334 = vrot.slane %v333, 4
    %v335 = vadd.f32 %v333, %v334
    %v336 = vrot.slane %v335, 2
    %v337 = vadd.f32 %v335, %v336
    %v338 = vrot.slane %v337, 1
    %v339 = vadd.f32 %v337, %v338
    %v340 = vmul.f32 %v339, %v269
    %v341 = vadd.f32 %v340, 1e-05
    %v342 = vrsqrt.pop %v341
    %v343 = vmul.f32 %v271, %v342
    %v344 = vmul.f32 %v272, %v342
    %v345 = vmul.f32 %v273, %v342
    %v346 = vmul.f32 %v274, %v342
    %v347 = vmul.f32 %v275, %v342
    %v348 = vmul.f32 %v276, %v342
    %v349 = vmul.f32 %v277, %v342
    %v350 = vmul.f32 %v278, %v342
    %v351 = vmul.f32 %v279, %v342
    %v352 = vmul.f32 %v280, %v342
    %v353 = vmul.f32 %v281, %v342
    %v354 = vmul.f32 %v282, %v342
    %v355 = vmul.f32 %v283, %v342
    %v356 = vmul.f32 %v284, %v342
    %v357 = vmul.f32 %v285, %v342
    %v358 = vmul.f32 %v286, %v342
    %v359 = vlaneseq
    %v360 = vshrl.u32 %v359, 7
    %v361 = vsub.s32 1, %v360
    %v362 = vrot.slane %v16, %v361
    %v363 = vmul.f32 %v343, %v362
    %v364 = vmul.f32 %v344, %v362
    %v365 = vmul.f32 %v345, %v362
    %v366 = vmul.f32 %v346, %v362
    %v367 = vmul.f32 %v347, %v362
    %v368 = vmul.f32 %v348, %v362
    %v369 = vmul.f32 %v349, %v362
    %v370 = vmul.f32 %v350, %v362
    %v371 = vmul.f32 %v351, %v362
    %v372 = vmul.f32 %v352, %v362
    %v373 = vmul.f32 %v353, %v362
    %v374 = vmul.f32 %v354, %v362
    %v375 = vmul.f32 %v355, %v362
    %v376 = vmul.f32 %v356, %v362
    %v377 = vmul.f32 %v357, %v362
    %v378 = vmul.f32 %v358, %v362
    %v379 = vlaneseq
    %v380 = vshrl.u32 %v379, 7
    %v381 = vsub.s32 2, %v380
    %v382 = vrot.slane %v16, %v381
    %v383 = vadd.f32 %v363, %v382
    %v384 = vadd.f32 %v364, %v382
    %v385 = vadd.f32 %v365, %v382
    %v386 = vadd.f32 %v366, %v382
    %v387 = vadd.f32 %v367, %v382
    %v388 = vadd.f32 %v368, %v382
    %v389 = vadd.f32 %v369, %v382
    %v390 = vadd.f32 %v370, %v382
    %v391 = vadd.f32 %v371, %v382
    %v392 = vadd.f32 %v372, %v382
    %v393 = vadd.f32 %v373, %v382
    %v394 = vadd.f32 %v374, %v382
    %v395 = vadd.f32 %v375, %v382
    %v396 = vadd.f32 %v376, %v382
    %v397 = vadd.f32 %v377, %v382
    %v398 = vadd.f32 %v378, %v382
    %v399 = vld [vmem:[%s2] sm:$0xf]
    %v400 = vld [vmem:[%s2 + $0x4] sm:$0xf]
    %v401 = vld [vmem:[%s2 + $0x8] sm:$0xf]
    %v402 = vld [vmem:[%s2 + $0xc] sm:$0xf]
    %v403 = vld [vmem:[%s2 + $0x10] sm:$0xf]
    %v404 = vld [vmem:[%s2 + $0x14] sm:$0xf]
    %v405 = vld [vmem:[%s2 + $0x18] sm:$0xf]
    %v406 = vld [vmem:[%s2 + $0x1c] sm:$0xf]
    %v407 = vld [vmem:[%s2 + $0x20] sm:$0xf]
    %v408 = vld [vmem:[%s2 + $0x24] sm:$0xf]
    %v409 = vld [vmem:[%s2 + $0x28] sm:$0xf]
    %v410 = vld [vmem:[%s2 + $0x2c] sm:$0xf]
    %v411 = vld [vmem:[%s2 + $0x30] sm:$0xf]
    %v412 = vld [vmem:[%s2 + $0x34] sm:$0xf]
    %v413 = vld [vmem:[%s2 + $0x38] sm:$0xf]
    %v414 = vld [vmem:[%s2 + $0x3c] sm:$0xf]
    %v415 = vld [vmem:[%s2 + $0x40] sm:$0xf]
    %v416 = vld [vmem:[%s2 + $0x44] sm:$0xf]
    %v417 = vld [vmem:[%s2 + $0x48] sm:$0xf]
    %v418 = vld [vmem:[%s2 + $0x4c] sm:$0xf]
    %v419 = vld [vmem:[%s2 + $0x50] sm:$0xf]
    %v420 = vld [vmem:[%s2 + $0x54] sm:$0xf]
    %v421 = vld [vmem:[%s2 + $0x58] sm:$0xf]
    %v422 = vld [vmem:[%s2 + $0x5c] sm:$0xf]
    %v423 = vld [vmem:[%s2 + $0x60] sm:$0xf]
    %v424 = vld [vmem:[%s2 + $0x64] sm:$0xf]
    %v425 = vld [vmem:[%s2 + $0x68] sm:$0xf]
    %v426 = vld [vmem:[%s2 + $0x6c] sm:$0xf]
    %v427 = vld [vmem:[%s2 + $0x70] sm:$0xf]
    %v428 = vld [vmem:[%s2 + $0x74] sm:$0xf]
    %v429 = vld [vmem:[%s2 + $0x78] sm:$0xf]
    %v430 = vld [vmem:[%s2 + $0x7c] sm:$0xf]
    %v431 = vld [vmem:[%s2 + $0x80] sm:$0xf]
    %v432 = vld [vmem:[%s2 + $0x84] sm:$0xf]
    %v433 = vld [vmem:[%s2 + $0x88] sm:$0xf]
    %v434 = vld [vmem:[%s2 + $0x8c] sm:$0xf]
    %v435 = vld [vmem:[%s2 + $0x90] sm:$0xf]
    %v436 = vld [vmem:[%s2 + $0x94] sm:$0xf]
    %v437 = vld [vmem:[%s2 + $0x98] sm:$0xf]
    %v438 = vld [vmem:[%s2 + $0x9c] sm:$0xf]
    %v439 = vld [vmem:[%s2 + $0xa0] sm:$0xf]
    %v440 = vld [vmem:[%s2 + $0xa4] sm:$0xf]
    %v441 = vld [vmem:[%s2 + $0xa8] sm:$0xf]
    %v442 = vld [vmem:[%s2 + $0xac] sm:$0xf]
    %v443 = vld [vmem:[%s2 + $0xb0] sm:$0xf]
    %v444 = vld [vmem:[%s2 + $0xb4] sm:$0xf]
    %v445 = vld [vmem:[%s2 + $0xb8] sm:$0xf]
    %v446 = vld [vmem:[%s2 + $0xbc] sm:$0xf]
    %v447 = vld [vmem:[%s2 + $0xc0] sm:$0xf]
    %v448 = vld [vmem:[%s2 + $0xc4] sm:$0xf]
    %v449 = vld [vmem:[%s2 + $0xc8] sm:$0xf]
    %v450 = vld [vmem:[%s2 + $0xcc] sm:$0xf]
    %v451 = vld [vmem:[%s2 + $0xd0] sm:$0xf]
    %v452 = vld [vmem:[%s2 + $0xd4] sm:$0xf]
    %v453 = vld [vmem:[%s2 + $0xd8] sm:$0xf]
    %v454 = vld [vmem:[%s2 + $0xdc] sm:$0xf]
    %v455 = vld [vmem:[%s2 + $0xe0] sm:$0xf]
    %v456 = vld [vmem:[%s2 + $0xe4] sm:$0xf]
    %v457 = vld [vmem:[%s2 + $0xe8] sm:$0xf]
    %v458 = vld [vmem:[%s2 + $0xec] sm:$0xf]
    %v459 = vld [vmem:[%s2 + $0xf0] sm:$0xf]
    %v460 = vld [vmem:[%s2 + $0xf4] sm:$0xf]
    %v461 = vld [vmem:[%s2 + $0xf8] sm:$0xf]
    %v462 = vld [vmem:[%s2 + $0xfc] sm:$0xf]
    %v463 = vpack.c.bf16 %v384, %v383
    %v464 = vpack.c.bf16 %v386, %v385
    %v465 = vpack.c.bf16 %v388, %v387
    %v466 = vpack.c.bf16 %v390, %v389
    %v467 = vpack.c.bf16 %v392, %v391
    %v468 = vpack.c.bf16 %v394, %v393
    %v469 = vpack.c.bf16 %v396, %v395
    %v470 = vpack.c.bf16 %v398, %v397
    %v535 = vunpack.c.l.b16 %v399
    %v536 = vunpack.c.l.b16 %v400
    %v537 = vunpack.c.l.b16 %v401
    %v538 = vunpack.c.l.b16 %v402
    %v539 = vunpack.c.l.b16 %v403
    %v540 = vunpack.c.l.b16 %v404
    %v541 = vunpack.c.l.b16 %v405
    %v542 = vunpack.c.l.b16 %v406
    %v543 = vunpack.c.l.b16 %v407
    %v544 = vunpack.c.l.b16 %v408
    %v545 = vunpack.c.l.b16 %v409
    %v546 = vunpack.c.l.b16 %v410
    %v547 = vunpack.c.l.b16 %v411
    %v548 = vunpack.c.l.b16 %v412
    %v549 = vunpack.c.l.b16 %v413
    %v550 = vunpack.c.l.b16 %v414
    %v551 = vunpack.c.l.b16 %v415
    %v552 = vunpack.c.l.b16 %v416
    %v553 = vunpack.c.l.b16 %v417
    %v554 = vunpack.c.l.b16 %v418
    %v555 = vunpack.c.l.b16 %v419
    %v556 = vunpack.c.l.b16 %v420
    %v557 = vunpack.c.l.b16 %v421
    %v558 = vunpack.c.l.b16 %v422
    %v559 = vunpack.c.l.b16 %v423
    %v560 = vunpack.c.l.b16 %v424
    %v561 = vunpack.c.l.b16 %v425
    %v562 = vunpack.c.l.b16 %v426
    %v563 = vunpack.c.l.b16 %v427
    %v564 = vunpack.c.l.b16 %v428
    %v565 = vunpack.c.l.b16 %v429
    %v566 = vunpack.c.l.b16 %v430
    %v567 = vunpack.c.l.b16 %v431
    %v568 = vunpack.c.l.b16 %v432
    %v569 = vunpack.c.l.b16 %v433
    %v570 = vunpack.c.l.b16 %v434
    %v571 = vunpack.c.l.b16 %v435
    %v572 = vunpack.c.l.b16 %v436
    %v573 = vunpack.c.l.b16 %v437
    %v574 = vunpack.c.l.b16 %v438
    %v575 = vunpack.c.l.b16 %v439
    %v576 = vunpack.c.l.b16 %v440
    %v577 = vunpack.c.l.b16 %v441
    %v578 = vunpack.c.l.b16 %v442
    %v579 = vunpack.c.l.b16 %v443
    %v580 = vunpack.c.l.b16 %v444
    %v581 = vunpack.c.l.b16 %v445
    %v582 = vunpack.c.l.b16 %v446
    %v583 = vunpack.c.l.b16 %v447
    %v584 = vunpack.c.l.b16 %v448
    %v585 = vunpack.c.l.b16 %v449
    %v586 = vunpack.c.l.b16 %v450
    %v587 = vunpack.c.l.b16 %v451
    %v588 = vunpack.c.l.b16 %v452
    %v589 = vunpack.c.l.b16 %v453
    %v590 = vunpack.c.l.b16 %v454
    %v591 = vunpack.c.l.b16 %v455
    %v592 = vunpack.c.l.b16 %v456
    %v593 = vunpack.c.l.b16 %v457
    %v594 = vunpack.c.l.b16 %v458
    %v595 = vunpack.c.l.b16 %v459
    %v596 = vunpack.c.l.b16 %v460
    %v597 = vunpack.c.l.b16 %v461
    %v598 = vunpack.c.l.b16 %v462
    %v599 = vpack.c.b16 %v536, %v535
    %v600 = vpack.c.b16 %v538, %v537
    %v601 = vpack.c.b16 %v540, %v539
    %v602 = vpack.c.b16 %v542, %v541
    %v603 = vpack.c.b16 %v544, %v543
    %v604 = vpack.c.b16 %v546, %v545
    %v605 = vpack.c.b16 %v548, %v547
    %v606 = vpack.c.b16 %v550, %v549
    %v607 = vpack.c.b16 %v552, %v551
    %v608 = vpack.c.b16 %v554, %v553
    %v609 = vpack.c.b16 %v556, %v555
    %v610 = vpack.c.b16 %v558, %v557
    %v611 = vpack.c.b16 %v560, %v559
    %v612 = vpack.c.b16 %v562, %v561
    %v613 = vpack.c.b16 %v564, %v563
    %v614 = vpack.c.b16 %v566, %v565
    %v615 = vpack.c.b16 %v568, %v567
    %v616 = vpack.c.b16 %v570, %v569
    %v617 = vpack.c.b16 %v572, %v571
    %v618 = vpack.c.b16 %v574, %v573
    %v619 = vpack.c.b16 %v576, %v575
    %v620 = vpack.c.b16 %v578, %v577
    %v621 = vpack.c.b16 %v580, %v579
    %v622 = vpack.c.b16 %v582, %v581
    %v623 = vpack.c.b16 %v584, %v583
    %v624 = vpack.c.b16 %v586, %v585
    %v625 = vpack.c.b16 %v588, %v587
    %v626 = vpack.c.b16 %v590, %v589
    %v627 = vpack.c.b16 %v592, %v591
    %v628 = vpack.c.b16 %v594, %v593
    %v629 = vpack.c.b16 %v596, %v595
    %v630 = vpack.c.b16 %v598, %v597
    %663 = vmatprep.subr.bf16.mxu0 0
    %664 = vmatpush1.bf16.msra.mxu0 %v463
    %665 = vmatprep.subr.bf16.mxu0 0
    %666 = vmatpush1.bf16.msra.mxu0 %v464
    %667 = vmatprep.subr.bf16.mxu0 0
    %668 = vmatpush1.bf16.msra.mxu0 %v465
    %669 = vmatprep.subr.bf16.mxu0 0
    %670 = vmatpush1.bf16.msra.mxu0 %v466
    %671 = vmatprep.subr.bf16.mxu0 0
    %672 = vmatpush1.bf16.msra.mxu0 %v467
    %673 = vmatprep.subr.bf16.mxu0 0
    %674 = vmatpush1.bf16.msra.mxu0 %v468
    %675 = vmatprep.subr.bf16.mxu0 0
    %676 = vmatpush1.bf16.msra.mxu0 %v469
    %677 = vmatprep.subr.bf16.mxu0 0
    %678 = vmatpush1.bf16.msra.mxu0 %v470
    %679 = vmatprep.subr.bf16.mxu0 0
    %680 = vmatpush1.bf16.msra.mxu0 0
    %681 = vmatprep.subr.bf16.mxu0 0
    %682 = vmatpush1.bf16.msra.mxu0 0
    %683 = vmatprep.subr.bf16.mxu0 0
    %684 = vmatpush1.bf16.msra.mxu0 0
    %685 = vmatprep.subr.bf16.mxu0 0
    %686 = vmatpush1.bf16.msra.mxu0 0
    %687 = vmatprep.subr.bf16.mxu0 0
    %688 = vmatpush1.bf16.msra.mxu0 0
    %689 = vmatprep.subr.bf16.mxu0 0
    %690 = vmatpush1.bf16.msra.mxu0 0
    %691 = vmatprep.subr.bf16.mxu0 0
    %692 = vmatpush1.bf16.msra.mxu0 0
    %693 = vmatprep.subr.bf16.mxu0 0
    %694 = vmatpush1.bf16.msra.mxu0 0
    %695 = vmatprep.mubr.bf16.mxu0 0
    %696 = vmatmul.mubr.bf16.gmra.mrb[0].mxu0 %v599
    %v697 = vpop.f32.mrb[0].mxu0
    %v698 = vadd.f32 0.0, %v697
    %v699 = vpop.f32.mrb[0].mxu0
    %v700 = vpop.f32.mrb[0].mxu0
    %v701 = vadd.f32 0.0, %v700
    %v702 = vpop.f32.mrb[0].mxu0
    %703 = vmatprep.mubr.bf16.mxu0 0
    %704 = vmatmul.mubr.bf16.gmra.mrb[0].mxu0 %v600
    %v705 = vpop.f32.mrb[0].mxu0
    %v706 = vadd.f32 0.0, %v705
    %v707 = vpop.f32.mrb[0].mxu0
    %v708 = vpop.f32.mrb[0].mxu0
    %v709 = vadd.f32 0.0, %v708
    %v710 = vpop.f32.mrb[0].mxu0
    %711 = vmatprep.mubr.bf16.mxu0 0
    %712 = vmatmul.mubr.bf16.gmra.mrb[0].mxu0 %v601
    %v713 = vpop.f32.mrb[0].mxu0
    %v714 = vadd.f32 0.0, %v713
    %v715 = vpop.f32.mrb[0].mxu0
    %v716 = vpop.f32.mrb[0].mxu0
    %v717 = vadd.f32 0.0, %v716
    %v718 = vpop.f32.mrb[0].mxu0
    %719 = vmatprep.mubr.bf16.mxu0 0
    %720 = vmatmul.mubr.bf16.gmra.mrb[0].mxu0 %v602
    %v721 = vpop.f32.mrb[0].mxu0
    %v722 = vadd.f32 0.0, %v721
    %v723 = vpop.f32.mrb[0].mxu0
    %v724 = vpop.f32.mrb[0].mxu0
    %v725 = vadd.f32 0.0, %v724
    %v726 = vpop.f32.mrb[0].mxu0
    %727 = vmatprep.mubr.bf16.mxu0 0
    %728 = vmatmul.mubr.bf16.gmra.mrb[0].mxu0 %v603
    %v729 = vpop.f32.mrb[0].mxu0
    %v730 = vadd.f32 0.0, %v729
    %v731 = vpop.f32.mrb[0].mxu0
    %v732 = vpop.f32.mrb[0].mxu0
    %v733 = vadd.f32 0.0, %v732
    %v734 = vpop.f32.mrb[0].mxu0
    %735 = vmatprep.mubr.bf16.mxu0 0
    %736 = vmatmul.mubr.bf16.gmra.mrb[0].mxu0 %v604
    %v737 = vpop.f32.mrb[0].mxu0
    %v738 = vadd.f32 0.0, %v737
    %v739 = vpop.f32.mrb[0].mxu0
    %v740 = vpop.f32.mrb[0].mxu0
    %v741 = vadd.f32 0.0, %v740
    %v742 = vpop.f32.mrb[0].mxu0
    %743 = vmatprep.mubr.bf16.mxu0 0
    %744 = vmatmul.mubr.bf16.gmra.mrb[0].mxu0 %v605
    %v745 = vpop.f32.mrb[0].mxu0
    %v746 = vadd.f32 0.0, %v745
    %v747 = vpop.f32.mrb[0].mxu0
    %v748 = vpop.f32.mrb[0].mxu0
    %v749 = vadd.f32 0.0, %v748
    %v750 = vpop.f32.mrb[0].mxu0
    %751 = vmatprep.mubr.bf16.mxu0 0
    %752 = vmatmul.mubr.bf16.gmra.mrb[0].mxu0 %v606
    %v753 = vpop.f32.mrb[0].mxu0
    %v754 = vadd.f32 0.0, %v753
    %v755 = vpop.f32.mrb[0].mxu0
    %v756 = vpop.f32.mrb[0].mxu0
    %v757 = vadd.f32 0.0, %v756
    %v758 = vpop.f32.mrb[0].mxu0
    %759 = vmatprep.mubr.bf16.mxu0 0
    %760 = vmatmul.mubr.bf16.gmra.mrb[0].mxu0 %v607
    %v761 = vpop.f32.mrb[0].mxu0
    %v762 = vadd.f32 0.0, %v761
    %v763 = vpop.f32.mrb[0].mxu0
    %v764 = vpop.f32.mrb[0].mxu0
    %v765 = vadd.f32 0.0, %v764
    %v766 = vpop.f32.mrb[0].mxu0
    %767 = vmatprep.mubr.bf16.mxu0 0
    %768 = vmatmul.mubr.bf16.gmra.mrb[0].mxu0 %v608
    %v769 = vpop.f32.mrb[0].mxu0
    %v770 = vadd.f32 0.0, %v769
    %v771 = vpop.f32.mrb[0].mxu0
    %v772 = vpop.f32.mrb[0].mxu0
    %v773 = vadd.f32 0.0, %v772
    %v774 = vpop.f32.mrb[0].mxu0
    %775 = vmatprep.mubr.bf16.mxu0 0
    %776 = vmatmul.mubr.bf16.gmra.mrb[0].mxu0 %v609
    %v777 = vpop.f32.mrb[0].mxu0
    %v778 = vadd.f32 0.0, %v777
    %v779 = vpop.f32.mrb[0].mxu0
    %v780 = vpop.f32.mrb[0].mxu0
    %v781 = vadd.f32 0.0, %v780
    %v782 = vpop.f32.mrb[0].mxu0
    %783 = vmatprep.mubr.bf16.mxu0 0
    %784 = vmatmul.mubr.bf16.gmra.mrb[0].mxu0 %v610
    %v785 = vpop.f32.mrb[0].mxu0
    %v786 = vadd.f32 0.0, %v785
    %v787 = vpop.f32.mrb[0].mxu0
    %v788 = vpop.f32.mrb[0].mxu0
    %v789 = vadd.f32 0.0, %v788
    %v790 = vpop.f32.mrb[0].mxu0
    %791 = vmatprep.mubr.bf16.mxu0 0
    %792 = vmatmul.mubr.bf16.gmra.mrb[0].mxu0 %v611
    %v793 = vpop.f32.mrb[0].mxu0
    %v794 = vadd.f32 0.0, %v793
    %v795 = vpop.f32.mrb[0].mxu0
    %v796 = vpop.f32.mrb[0].mxu0
    %v797 = vadd.f32 0.0, %v796
    %v798 = vpop.f32.mrb[0].mxu0
    %799 = vmatprep.mubr.bf16.mxu0 0
    %800 = vmatmul.mubr.bf16.gmra.mrb[0].mxu0 %v612
    %v801 = vpop.f32.mrb[0].mxu0
    %v802 = vadd.f32 0.0, %v801
    %v803 = vpop.f32.mrb[0].mxu0
    %v804 = vpop.f32.mrb[0].mxu0
    %v805 = vadd.f32 0.0, %v804
    %v806 = vpop.f32.mrb[0].mxu0
    %807 = vmatprep.mubr.bf16.mxu0 0
    %808 = vmatmul.mubr.bf16.gmra.mrb[0].mxu0 %v613
    %v809 = vpop.f32.mrb[0].mxu0
    %v810 = vadd.f32 0.0, %v809
    %v811 = vpop.f32.mrb[0].mxu0
    %v812 = vpop.f32.mrb[0].mxu0
    %v813 = vadd.f32 0.0, %v812
    %v814 = vpop.f32.mrb[0].mxu0
    %815 = vmatprep.mubr.bf16.mxu0 0
    %816 = vmatmul.mubr.bf16.gmra.mrb[0].mxu0 %v614
    %v817 = vpop.f32.mrb[0].mxu0
    %v818 = vadd.f32 0.0, %v817
    %v819 = vpop.f32.mrb[0].mxu0
    %v820 = vpop.f32.mrb[0].mxu0
    %v821 = vadd.f32 0.0, %v820
    %v822 = vpop.f32.mrb[0].mxu0
    %823 = vmatprep.mubr.bf16.mxu0 0
    %824 = vmatmul.mubr.bf16.gmra.mrb[0].mxu0 %v615
    %v825 = vpop.f32.mrb[0].mxu0
    %v826 = vadd.f32 0.0, %v825
    %v827 = vpop.f32.mrb[0].mxu0
    %v828 = vpop.f32.mrb[0].mxu0
    %v829 = vadd.f32 0.0, %v828
    %v830 = vpop.f32.mrb[0].mxu0
    %831 = vmatprep.mubr.bf16.mxu0 0
    %832 = vmatmul.mubr.bf16.gmra.mrb[0].mxu0 %v616
    %v833 = vpop.f32.mrb[0].mxu0
    %v834 = vadd.f32 0.0, %v833
    %v835 = vpop.f32.mrb[0].mxu0
    %v836 = vpop.f32.mrb[0].mxu0
    %v837 = vadd.f32 0.0, %v836
    %v838 = vpop.f32.mrb[0].mxu0
    %839 = vmatprep.mubr.bf16.mxu0 0
    %840 = vmatmul.mubr.bf16.gmra.mrb[0].mxu0 %v617
    %v841 = vpop.f32.mrb[0].mxu0
    %v842 = vadd.f32 0.0, %v841
    %v843 = vpop.f32.mrb[0].mxu0
    %v844 = vpop.f32.mrb[0].mxu0
    %v845 = vadd.f32 0.0, %v844
    %v846 = vpop.f32.mrb[0].mxu0
    %847 = vmatprep.mubr.bf16.mxu0 0
    %848 = vmatmul.mubr.bf16.gmra.mrb[0].mxu0 %v618
    %v849 = vpop.f32.mrb[0].mxu0
    %v850 = vadd.f32 0.0, %v849
    %v851 = vpop.f32.mrb[0].mxu0
    %v852 = vpop.f32.mrb[0].mxu0
    %v853 = vadd.f32 0.0, %v852
    %v854 = vpop.f32.mrb[0].mxu0
    %855 = vmatprep.mubr.bf16.mxu0 0
    %856 = vmatmul.mubr.bf16.gmra.mrb[0].mxu0 %v619
    %v857 = vpop.f32.mrb[0].mxu0
    %v858 = vadd.f32 0.0, %v857
    %v859 = vpop.f32.mrb[0].mxu0
    %v860 = vpop.f32.mrb[0].mxu0
    %v861 = vadd.f32 0.0, %v860
    %v862 = vpop.f32.mrb[0].mxu0
    %863 = vmatprep.mubr.bf16.mxu0 0
    %864 = vmatmul.mubr.bf16.gmra.mrb[0].mxu0 %v620
    %v865 = vpop.f32.mrb[0].mxu0
    %v866 = vadd.f32 0.0, %v865
    %v867 = vpop.f32.mrb[0].mxu0
    %v868 = vpop.f32.mrb[0].mxu0
    %v869 = vadd.f32 0.0, %v868
    %v870 = vpop.f32.mrb[0].mxu0
    %871 = vmatprep.mubr.bf16.mxu0 0
    %872 = vmatmul.mubr.bf16.gmra.mrb[0].mxu0 %v621
    %v873 = vpop.f32.mrb[0].mxu0
    %v874 = vadd.f32 0.0, %v873
    %v875 = vpop.f32.mrb[0].mxu0
    %v876 = vpop.f32.mrb[0].mxu0
    %v877 = vadd.f32 0.0, %v876
    %v878 = vpop.f32.mrb[0].mxu0
    %879 = vmatprep.mubr.bf16.mxu0 0
    %880 = vmatmul.mubr.bf16.gmra.mrb[0].mxu0 %v622
    %v881 = vpop.f32.mrb[0].mxu0
    %v882 = vadd.f32 0.0, %v881
    %v883 = vpop.f32.mrb[0].mxu0
    %v884 = vpop.f32.mrb[0].mxu0
    %v885 = vadd.f32 0.0, %v884
    %v886 = vpop.f32.mrb[0].mxu0
    %887 = vmatprep.mubr.bf16.mxu0 0
    %888 = vmatmul.mubr.bf16.gmra.mrb[0].mxu0 %v623
    %v889 = vpop.f32.mrb[0].mxu0
    %v890 = vadd.f32 0.0, %v889
    %v891 = vpop.f32.mrb[0].mxu0
    %v892 = vpop.f32.mrb[0].mxu0
    %v893 = vadd.f32 0.0, %v892
    %v894 = vpop.f32.mrb[0].mxu0
    %895 = vmatprep.mubr.bf16.mxu0 0
    %896 = vmatmul.mubr.bf16.gmra.mrb[0].mxu0 %v624
    %v897 = vpop.f32.mrb[0].mxu0
    %v898 = vadd.f32 0.0, %v897
    %v899 = vpop.f32.mrb[0].mxu0
    %v900 = vpop.f32.mrb[0].mxu0
    %v901 = vadd.f32 0.0, %v900
    %v902 = vpop.f32.mrb[0].mxu0
    %903 = vmatprep.mubr.bf16.mxu0 0
    %904 = vmatmul.mubr.bf16.gmra.mrb[0].mxu0 %v625
    %v905 = vpop.f32.mrb[0].mxu0
    %v906 = vadd.f32 0.0, %v905
    %v907 = vpop.f32.mrb[0].mxu0
    %v908 = vpop.f32.mrb[0].mxu0
    %v909 = vadd.f32 0.0, %v908
    %v910 = vpop.f32.mrb[0].mxu0
    %911 = vmatprep.mubr.bf16.mxu0 0
    %912 = vmatmul.mubr.bf16.gmra.mrb[0].mxu0 %v626
    %v913 = vpop.f32.mrb[0].mxu0
    %v914 = vadd.f32 0.0, %v913
    %v915 = vpop.f32.mrb[0].mxu0
    %v916 = vpop.f32.mrb[0].mxu0
    %v917 = vadd.f32 0.0, %v916
    %v918 = vpop.f32.mrb[0].mxu0
    %919 = vmatprep.mubr.bf16.mxu0 0
    %920 = vmatmul.mubr.bf16.gmra.mrb[0].mxu0 %v627
    %v921 = vpop.f32.mrb[0].mxu0
    %v922 = vadd.f32 0.0, %v921
    %v923 = vpop.f32.mrb[0].mxu0
    %v924 = vpop.f32.mrb[0].mxu0
    %v925 = vadd.f32 0.0, %v924
    %v926 = vpop.f32.mrb[0].mxu0
    %927 = vmatprep.mubr.bf16.mxu0 0
    %928 = vmatmul.mubr.bf16.gmra.mrb[0].mxu0 %v628
    %v929 = vpop.f32.mrb[0].mxu0
    %v930 = vadd.f32 0.0, %v929
    %v931 = vpop.f32.mrb[0].mxu0
    %v932 = vpop.f32.mrb[0].mxu0
    %v933 = vadd.f32 0.0, %v932
    %v934 = vpop.f32.mrb[0].mxu0
    %935 = vmatprep.mubr.bf16.mxu0 0
    %936 = vmatmul.mubr.bf16.gmra.mrb[0].mxu0 %v629
    %v937 = vpop.f32.mrb[0].mxu0
    %v938 = vadd.f32 0.0, %v937
    %v939 = vpop.f32.mrb[0].mxu0
    %v940 = vpop.f32.mrb[0].mxu0
    %v941 = vadd.f32 0.0, %v940
    %v942 = vpop.f32.mrb[0].mxu0
    %943 = vmatprep.mubr.bf16.mxu0 0
    %944 = vmatmul.mubr.bf16.gmra.mrb[0].mxu0 %v630
    %v945 = vpop.f32.mrb[0].mxu0
    %v946 = vadd.f32 0.0, %v945
    %v947 = vpop.f32.mrb[0].mxu0
    %v948 = vpop.f32.mrb[0].mxu0
    %v949 = vadd.f32 0.0, %v948
    %v950 = vpop.f32.mrb[0].mxu0
    %951 = vdwg.mxu0
    %956 = vrot.lane.b32.xlu0 %v714, 32
    %v957 = vpop.permute.xlu0 %956
    %958 = vrot.lane.b32.xlu0 %v717, 32
    %v959 = vpop.permute.xlu0 %958
    %960 = vrot.lane.b32.xlu0 %v722, 32
    %v961 = vpop.permute.xlu0 %960
    %962 = vrot.lane.b32.xlu0 %v725, 32
    %v963 = vpop.permute.xlu0 %962
    %972 = vrot.lane.b32.xlu0 %v730, 64
    %v973 = vpop.permute.xlu0 %972
    %974 = vrot.lane.b32.xlu0 %v733, 64
    %v975 = vpop.permute.xlu0 %974
    %976 = vrot.lane.b32.xlu0 %v738, 64
    %v977 = vpop.permute.xlu0 %976
    %978 = vrot.lane.b32.xlu0 %v741, 64
    %v979 = vpop.permute.xlu0 %978
    %988 = vrot.lane.b32.xlu0 %v746, 96
    %v989 = vpop.permute.xlu0 %988
    %990 = vrot.lane.b32.xlu0 %v749, 96
    %v991 = vpop.permute.xlu0 %990
    %992 = vrot.lane.b32.xlu0 %v754, 96
    %v993 = vpop.permute.xlu0 %992
    %994 = vrot.lane.b32.xlu0 %v757, 96
    %v995 = vpop.permute.xlu0 %994
    %v1000 = vsel %vm62, %v698, %v957
    %v1001 = vsel %vm62, %v701, %v959
    %v1002 = vsel %vm62, %v706, %v961
    %v1003 = vsel %vm62, %v709, %v963
    %vm1004 = vcmask 523264
    %v1005 = vsel %vm1004, %v1000, %v973
    %v1006 = vsel %vm1004, %v1001, %v975
    %v1007 = vsel %vm1004, %v1002, %v977
    %v1008 = vsel %vm1004, %v1003, %v979
    %vm1009 = vcmask 785408
    %v1010 = vsel %vm1009, %v1005, %v989
    %v1011 = vsel %vm1009, %v1006, %v991
    %v1012 = vsel %vm1009, %v1007, %v993
    %v1013 = vsel %vm1009, %v1008, %v995
    %v1014 = vpack.c.bf16 %v1011, %v1010
    %v1015 = vpack.c.bf16 %v1013, %v1012
    %v1016 = vld [vmem:[%s1 + $0x10] sm:$0xf]
    %v1017 = vld [vmem:[%s1 + $0x14] sm:$0xf]
    %v1018 = vld [vmem:[%s1 + $0x18] sm:$0xf]
    %v1019 = vld [vmem:[%s1 + $0x1c] sm:$0xf]
    %v1020 = vld [vmem:[%s1 + $0x20] sm:$0xf]
    %v1021 = vld [vmem:[%s1 + $0x24] sm:$0xf]
    %v1022 = vld [vmem:[%s1 + $0x28] sm:$0xf]
    %v1023 = vld [vmem:[%s1 + $0x2c] sm:$0xf]
    %v1024 = vld [vmem:[%s1 + $0x30] sm:$0xf]
    %v1025 = vld [vmem:[%s1 + $0x34] sm:$0xf]
    %v1026 = vld [vmem:[%s1 + $0x38] sm:$0xf]
    %v1027 = vld [vmem:[%s1 + $0x3c] sm:$0xf]
    %v1028 = vld [vmem:[%s1 + $0x40] sm:$0xf]
    %v1029 = vld [vmem:[%s1 + $0x44] sm:$0xf]
    %v1030 = vld [vmem:[%s1 + $0x48] sm:$0xf]
    %v1031 = vld [vmem:[%s1 + $0x4c] sm:$0xf]
    %1036 = vrot.lane.b32.xlu0 %v778, 32
    %v1037 = vpop.permute.xlu0 %1036
    %1038 = vrot.lane.b32.xlu0 %v781, 32
    %v1039 = vpop.permute.xlu0 %1038
    %1040 = vrot.lane.b32.xlu0 %v786, 32
    %v1041 = vpop.permute.xlu0 %1040
    %1042 = vrot.lane.b32.xlu0 %v789, 32
    %v1043 = vpop.permute.xlu0 %1042
    %1052 = vrot.lane.b32.xlu0 %v794, 64
    %v1053 = vpop.permute.xlu0 %1052
    %1054 = vrot.lane.b32.xlu0 %v797, 64
    %v1055 = vpop.permute.xlu0 %1054
    %1056 = vrot.lane.b32.xlu0 %v802, 64
    %v1057 = vpop.permute.xlu0 %1056
    %1058 = vrot.lane.b32.xlu0 %v805, 64
    %v1059 = vpop.permute.xlu0 %1058
    %1068 = vrot.lane.b32.xlu0 %v810, 96
    %v1069 = vpop.permute.xlu0 %1068
    %1070 = vrot.lane.b32.xlu0 %v813, 96
    %v1071 = vpop.permute.xlu0 %1070
    %1072 = vrot.lane.b32.xlu0 %v818, 96
    %v1073 = vpop.permute.xlu0 %1072
    %1074 = vrot.lane.b32.xlu0 %v821, 96
    %v1075 = vpop.permute.xlu0 %1074
    %v1080 = vsel %vm62, %v762, %v1037
    %v1081 = vsel %vm62, %v765, %v1039
    %v1082 = vsel %vm62, %v770, %v1041
    %v1083 = vsel %vm62, %v773, %v1043
    %v1084 = vsel %vm1004, %v1080, %v1053
    %v1085 = vsel %vm1004, %v1081, %v1055
    %v1086 = vsel %vm1004, %v1082, %v1057
    %v1087 = vsel %vm1004, %v1083, %v1059
    %v1088 = vsel %vm1009, %v1084, %v1069
    %v1089 = vsel %vm1009, %v1085, %v1071
    %v1090 = vsel %vm1009, %v1086, %v1073
    %v1091 = vsel %vm1009, %v1087, %v1075
    %v1092 = vpack.c.bf16 %v1089, %v1088
    %v1093 = vpack.c.bf16 %v1091, %v1090
    %v1094 = vld [vmem:[%s1 + $0x50] sm:$0xf]
    %v1095 = vld [vmem:[%s1 + $0x54] sm:$0xf]
    %v1096 = vld [vmem:[%s1 + $0x58] sm:$0xf]
    %v1097 = vld [vmem:[%s1 + $0x5c] sm:$0xf]
    %v1098 = vld [vmem:[%s1 + $0x60] sm:$0xf]
    %v1099 = vld [vmem:[%s1 + $0x64] sm:$0xf]
    %v1100 = vld [vmem:[%s1 + $0x68] sm:$0xf]
    %v1101 = vld [vmem:[%s1 + $0x6c] sm:$0xf]
    %v1102 = vld [vmem:[%s1 + $0x70] sm:$0xf]
    %v1103 = vld [vmem:[%s1 + $0x74] sm:$0xf]
    %v1104 = vld [vmem:[%s1 + $0x78] sm:$0xf]
    %v1105 = vld [vmem:[%s1 + $0x7c] sm:$0xf]
    %v1106 = vld [vmem:[%s1 + $0x80] sm:$0xf]
    %v1107 = vld [vmem:[%s1 + $0x84] sm:$0xf]
    %v1108 = vld [vmem:[%s1 + $0x88] sm:$0xf]
    %v1109 = vld [vmem:[%s1 + $0x8c] sm:$0xf]
    %v1126 = vunpack.c.l.b16 %v1094
    %v1127 = vunpack.c.l.b16 %v1095
    %v1128 = vunpack.c.l.b16 %v1096
    %v1129 = vunpack.c.l.b16 %v1097
    %v1130 = vunpack.c.l.b16 %v1098
    %v1131 = vunpack.c.l.b16 %v1099
    %v1132 = vunpack.c.l.b16 %v1100
    %v1133 = vunpack.c.l.b16 %v1101
    %v1134 = vunpack.c.l.b16 %v1102
    %v1135 = vunpack.c.l.b16 %v1103
    %v1136 = vunpack.c.l.b16 %v1104
    %v1137 = vunpack.c.l.b16 %v1105
    %v1138 = vunpack.c.l.b16 %v1106
    %v1139 = vunpack.c.l.b16 %v1107
    %v1140 = vunpack.c.l.b16 %v1108
    %v1141 = vunpack.c.l.b16 %v1109
    %v1142 = vpack.c.b16 %v1127, %v1126
    %v1143 = vpack.c.b16 %v1129, %v1128
    %v1144 = vpack.c.b16 %v1131, %v1130
    %v1145 = vpack.c.b16 %v1133, %v1132
    %v1146 = vpack.c.b16 %v1135, %v1134
    %v1147 = vpack.c.b16 %v1137, %v1136
    %v1148 = vpack.c.b16 %v1139, %v1138
    %v1149 = vpack.c.b16 %v1141, %v1140
    %1158 = vmatprep.subr.bf16.mxu0 0
    %1159 = vmatpush1.bf16.msra.mxu0 %v1142
    %1160 = vmatprep.subr.bf16.mxu0 0
    %1161 = vmatpush1.bf16.msra.mxu0 %v1143
    %1162 = vmatprep.subr.bf16.mxu0 0
    %1163 = vmatpush1.bf16.msra.mxu0 %v1144
    %1164 = vmatprep.subr.bf16.mxu0 0
    %1165 = vmatpush1.bf16.msra.mxu0 %v1145
    %1166 = vmatprep.subr.bf16.mxu0 0
    %1167 = vmatpush1.bf16.msra.mxu0 %v1146
    %1168 = vmatprep.subr.bf16.mxu0 0
    %1169 = vmatpush1.bf16.msra.mxu0 %v1147
    %1170 = vmatprep.subr.bf16.mxu0 0
    %1171 = vmatpush1.bf16.msra.mxu0 %v1148
    %1172 = vmatprep.subr.bf16.mxu0 0
    %1173 = vmatpush1.bf16.msra.mxu0 %v1149
    %1174 = vmatprep.subr.bf16.mxu0 0
    %1175 = vmatpush1.bf16.msra.mxu0 0
    %1176 = vmatprep.subr.bf16.mxu0 0
    %1177 = vmatpush1.bf16.msra.mxu0 0
    %1178 = vmatprep.subr.bf16.mxu0 0
    %1179 = vmatpush1.bf16.msra.mxu0 0
    %1180 = vmatprep.subr.bf16.mxu0 0
    %1181 = vmatpush1.bf16.msra.mxu0 0
    %1182 = vmatprep.subr.bf16.mxu0 0
    %1183 = vmatpush1.bf16.msra.mxu0 0
    %1184 = vmatprep.subr.bf16.mxu0 0
    %1185 = vmatpush1.bf16.msra.mxu0 0
    %1186 = vmatprep.subr.bf16.mxu0 0
    %1187 = vmatpush1.bf16.msra.mxu0 0
    %1188 = vmatprep.subr.bf16.mxu0 0
    %1189 = vmatpush1.bf16.msra.mxu0 0
    %1190 = vmatprep.mubr.bf16.mxu0 0
    %1191 = vmatmul.mubr.bf16.gmra.mrb[0].mxu0 %v1092
    %v1192 = vpop.f32.mrb[0].mxu0
    %v1193 = vadd.f32 0.0, %v1192
    %v1194 = vpop.f32.mrb[0].mxu0
    %v1195 = vpop.f32.mrb[0].mxu0
    %v1196 = vadd.f32 0.0, %v1195
    %v1197 = vpop.f32.mrb[0].mxu0
    %1198 = vmatprep.mubr.bf16.mxu0 0
    %1199 = vmatmul.mubr.bf16.gmra.mrb[0].mxu0 %v1093
    %v1200 = vpop.f32.mrb[0].mxu0
    %v1201 = vadd.f32 0.0, %v1200
    %v1202 = vpop.f32.mrb[0].mxu0
    %v1203 = vpop.f32.mrb[0].mxu0
    %v1204 = vadd.f32 0.0, %v1203
    %v1205 = vpop.f32.mrb[0].mxu0
    %1206 = vdwg.mxu0
    %v1223 = vunpack.c.l.b16 %v1016
    %v1224 = vunpack.c.l.b16 %v1017
    %v1225 = vunpack.c.l.b16 %v1018
    %v1226 = vunpack.c.l.b16 %v1019
    %v1227 = vunpack.c.l.b16 %v1020
    %v1228 = vunpack.c.l.b16 %v1021
    %v1229 = vunpack.c.l.b16 %v1022
    %v1230 = vunpack.c.l.b16 %v1023
    %v1231 = vunpack.c.l.b16 %v1024
    %v1232 = vunpack.c.l.b16 %v1025
    %v1233 = vunpack.c.l.b16 %v1026
    %v1234 = vunpack.c.l.b16 %v1027
    %v1235 = vunpack.c.l.b16 %v1028
    %v1236 = vunpack.c.l.b16 %v1029
    %v1237 = vunpack.c.l.b16 %v1030
    %v1238 = vunpack.c.l.b16 %v1031
    %v1239 = vpack.c.b16 %v1224, %v1223
    %v1240 = vpack.c.b16 %v1226, %v1225
    %v1241 = vpack.c.b16 %v1228, %v1227
    %v1242 = vpack.c.b16 %v1230, %v1229
    %v1243 = vpack.c.b16 %v1232, %v1231
    %v1244 = vpack.c.b16 %v1234, %v1233
    %v1245 = vpack.c.b16 %v1236, %v1235
    %v1246 = vpack.c.b16 %v1238, %v1237
    %1255 = vmatprep.subr.bf16.mxu0 0
    %1256 = vmatpush1.bf16.msra.mxu0 %v1239
    %1257 = vmatprep.subr.bf16.mxu0 0
    %1258 = vmatpush1.bf16.msra.mxu0 %v1240
    %1259 = vmatprep.subr.bf16.mxu0 0
    %1260 = vmatpush1.bf16.msra.mxu0 %v1241
    %1261 = vmatprep.subr.bf16.mxu0 0
    %1262 = vmatpush1.bf16.msra.mxu0 %v1242
    %1263 = vmatprep.subr.bf16.mxu0 0
    %1264 = vmatpush1.bf16.msra.mxu0 %v1243
    %1265 = vmatprep.subr.bf16.mxu0 0
    %1266 = vmatpush1.bf16.msra.mxu0 %v1244
    %1267 = vmatprep.subr.bf16.mxu0 0
    %1268 = vmatpush1.bf16.msra.mxu0 %v1245
    %1269 = vmatprep.subr.bf16.mxu0 0
    %1270 = vmatpush1.bf16.msra.mxu0 %v1246
    %1271 = vmatprep.subr.bf16.mxu0 0
    %1272 = vmatpush1.bf16.msra.mxu0 0
    %1273 = vmatprep.subr.bf16.mxu0 0
    %1274 = vmatpush1.bf16.msra.mxu0 0
    %1275 = vmatprep.subr.bf16.mxu0 0
    %1276 = vmatpush1.bf16.msra.mxu0 0
    %1277 = vmatprep.subr.bf16.mxu0 0
    %1278 = vmatpush1.bf16.msra.mxu0 0
    %1279 = vmatprep.subr.bf16.mxu0 0
    %1280 = vmatpush1.bf16.msra.mxu0 0
    %1281 = vmatprep.subr.bf16.mxu0 0
    %1282 = vmatpush1.bf16.msra.mxu0 0
    %1283 = vmatprep.subr.bf16.mxu0 0
    %1284 = vmatpush1.bf16.msra.mxu0 0
    %1285 = vmatprep.subr.bf16.mxu0 0
    %1286 = vmatpush1.bf16.msra.mxu0 0
    %1287 = vmatprep.mubr.bf16.mxu0 0
    %1288 = vmatmul.mubr.bf16.gmra.mrb[0].mxu0 %v1014
    %v1289 = vpop.f32.mrb[0].mxu0
    %v1290 = vadd.f32 %v1193, %v1289
    %v1291 = vpop.f32.mrb[0].mxu0
    %v1292 = vpop.f32.mrb[0].mxu0
    %v1293 = vadd.f32 %v1196, %v1292
    %v1294 = vpop.f32.mrb[0].mxu0
    %1295 = vmatprep.mubr.bf16.mxu0 0
    %1296 = vmatmul.mubr.bf16.gmra.mrb[0].mxu0 %v1015
    %v1297 = vpop.f32.mrb[0].mxu0
    %v1298 = vadd.f32 %v1201, %v1297
    %v1299 = vpop.f32.mrb[0].mxu0
    %v1300 = vpop.f32.mrb[0].mxu0
    %v1301 = vadd.f32 %v1204, %v1300
    %v1302 = vpop.f32.mrb[0].mxu0
    %1303 = vdwg.mxu0
    %1308 = vrot.lane.b32.xlu0 %v842, 32
    %v1309 = vpop.permute.xlu0 %1308
    %1310 = vrot.lane.b32.xlu0 %v845, 32
    %v1311 = vpop.permute.xlu0 %1310
    %1312 = vrot.lane.b32.xlu0 %v850, 32
    %v1313 = vpop.permute.xlu0 %1312
    %1314 = vrot.lane.b32.xlu0 %v853, 32
    %v1315 = vpop.permute.xlu0 %1314
    %1324 = vrot.lane.b32.xlu0 %v858, 64
    %v1325 = vpop.permute.xlu0 %1324
    %1326 = vrot.lane.b32.xlu0 %v861, 64
    %v1327 = vpop.permute.xlu0 %1326
    %1328 = vrot.lane.b32.xlu0 %v866, 64
    %v1329 = vpop.permute.xlu0 %1328
    %1330 = vrot.lane.b32.xlu0 %v869, 64
    %v1331 = vpop.permute.xlu0 %1330
    %1340 = vrot.lane.b32.xlu0 %v874, 96
    %v1341 = vpop.permute.xlu0 %1340
    %1342 = vrot.lane.b32.xlu0 %v877, 96
    %v1343 = vpop.permute.xlu0 %1342
    %1344 = vrot.lane.b32.xlu0 %v882, 96
    %v1345 = vpop.permute.xlu0 %1344
    %1346 = vrot.lane.b32.xlu0 %v885, 96
    %v1347 = vpop.permute.xlu0 %1346
    %v1352 = vsel %vm62, %v826, %v1309
    %v1353 = vsel %vm62, %v829, %v1311
    %v1354 = vsel %vm62, %v834, %v1313
    %v1355 = vsel %vm62, %v837, %v1315
    %v1356 = vsel %vm1004, %v1352, %v1325
    %v1357 = vsel %vm1004, %v1353, %v1327
    %v1358 = vsel %vm1004, %v1354, %v1329
    %v1359 = vsel %vm1004, %v1355, %v1331
    %v1360 = vsel %vm1009, %v1356, %v1341
    %v1361 = vsel %vm1009, %v1357, %v1343
    %v1362 = vsel %vm1009, %v1358, %v1345
    %v1363 = vsel %vm1009, %v1359, %v1347
    %v1364 = vpack.c.bf16 %v1361, %v1360
    %v1365 = vpack.c.bf16 %v1363, %v1362
    %v1366 = vld [vmem:[%s1 + $0x90] sm:$0xf]
    %v1367 = vld [vmem:[%s1 + $0x94] sm:$0xf]
    %v1368 = vld [vmem:[%s1 + $0x98] sm:$0xf]
    %v1369 = vld [vmem:[%s1 + $0x9c] sm:$0xf]
    %v1370 = vld [vmem:[%s1 + $0xa0] sm:$0xf]
    %v1371 = vld [vmem:[%s1 + $0xa4] sm:$0xf]
    %v1372 = vld [vmem:[%s1 + $0xa8] sm:$0xf]
    %v1373 = vld [vmem:[%s1 + $0xac] sm:$0xf]
    %v1374 = vld [vmem:[%s1 + $0xb0] sm:$0xf]
    %v1375 = vld [vmem:[%s1 + $0xb4] sm:$0xf]
    %v1376 = vld [vmem:[%s1 + $0xb8] sm:$0xf]
    %v1377 = vld [vmem:[%s1 + $0xbc] sm:$0xf]
    %v1378 = vld [vmem:[%s1 + $0xc0] sm:$0xf]
    %v1379 = vld [vmem:[%s1 + $0xc4] sm:$0xf]
    %v1380 = vld [vmem:[%s1 + $0xc8] sm:$0xf]
    %v1381 = vld [vmem:[%s1 + $0xcc] sm:$0xf]
    %v1398 = vunpack.c.l.b16 %v1366
    %v1399 = vunpack.c.l.b16 %v1367
    %v1400 = vunpack.c.l.b16 %v1368
    %v1401 = vunpack.c.l.b16 %v1369
    %v1402 = vunpack.c.l.b16 %v1370
    %v1403 = vunpack.c.l.b16 %v1371
    %v1404 = vunpack.c.l.b16 %v1372
    %v1405 = vunpack.c.l.b16 %v1373
    %v1406 = vunpack.c.l.b16 %v1374
    %v1407 = vunpack.c.l.b16 %v1375
    %v1408 = vunpack.c.l.b16 %v1376
    %v1409 = vunpack.c.l.b16 %v1377
    %v1410 = vunpack.c.l.b16 %v1378
    %v1411 = vunpack.c.l.b16 %v1379
    %v1412 = vunpack.c.l.b16 %v1380
    %v1413 = vunpack.c.l.b16 %v1381
    %v1414 = vpack.c.b16 %v1399, %v1398
    %v1415 = vpack.c.b16 %v1401, %v1400
    %v1416 = vpack.c.b16 %v1403, %v1402
    %v1417 = vpack.c.b16 %v1405, %v1404
    %v1418 = vpack.c.b16 %v1407, %v1406
    %v1419 = vpack.c.b16 %v1409, %v1408
    %v1420 = vpack.c.b16 %v1411, %v1410
    %v1421 = vpack.c.b16 %v1413, %v1412
    %1430 = vmatprep.subr.bf16.mxu0 0
    %1431 = vmatpush1.bf16.msra.mxu0 %v1414
    %1432 = vmatprep.subr.bf16.mxu0 0
    %1433 = vmatpush1.bf16.msra.mxu0 %v1415
    %1434 = vmatprep.subr.bf16.mxu0 0
    %1435 = vmatpush1.bf16.msra.mxu0 %v1416
    %1436 = vmatprep.subr.bf16.mxu0 0
    %1437 = vmatpush1.bf16.msra.mxu0 %v1417
    %1438 = vmatprep.subr.bf16.mxu0 0
    %1439 = vmatpush1.bf16.msra.mxu0 %v1418
    %1440 = vmatprep.subr.bf16.mxu0 0
    %1441 = vmatpush1.bf16.msra.mxu0 %v1419
    %1442 = vmatprep.subr.bf16.mxu0 0
    %1443 = vmatpush1.bf16.msra.mxu0 %v1420
    %1444 = vmatprep.subr.bf16.mxu0 0
    %1445 = vmatpush1.bf16.msra.mxu0 %v1421
    %1446 = vmatprep.subr.bf16.mxu0 0
    %1447 = vmatpush1.bf16.msra.mxu0 0
    %1448 = vmatprep.subr.bf16.mxu0 0
    %1449 = vmatpush1.bf16.msra.mxu0 0
    %1450 = vmatprep.subr.bf16.mxu0 0
    %1451 = vmatpush1.bf16.msra.mxu0 0
    %1452 = vmatprep.subr.bf16.mxu0 0
    %1453 = vmatpush1.bf16.msra.mxu0 0
    %1454 = vmatprep.subr.bf16.mxu0 0
    %1455 = vmatpush1.bf16.msra.mxu0 0
    %1456 = vmatprep.subr.bf16.mxu0 0
    %1457 = vmatpush1.bf16.msra.mxu0 0
    %1458 = vmatprep.subr.bf16.mxu0 0
    %1459 = vmatpush1.bf16.msra.mxu0 0
    %1460 = vmatprep.subr.bf16.mxu0 0
    %1461 = vmatpush1.bf16.msra.mxu0 0
    %1462 = vmatprep.mubr.bf16.mxu0 0
    %1463 = vmatmul.mubr.bf16.gmra.mrb[0].mxu0 %v1364
    %v1464 = vpop.f32.mrb[0].mxu0
    %v1465 = vadd.f32 0.0, %v1464
    %v1466 = vpop.f32.mrb[0].mxu0
    %v1467 = vpop.f32.mrb[0].mxu0
    %v1468 = vadd.f32 0.0, %v1467
    %v1469 = vpop.f32.mrb[0].mxu0
    %1470 = vmatprep.mubr.bf16.mxu0 0
    %1471 = vmatmul.mubr.bf16.gmra.mrb[0].mxu0 %v1365
    %v1472 = vpop.f32.mrb[0].mxu0
    %v1473 = vadd.f32 0.0, %v1472
    %v1474 = vpop.f32.mrb[0].mxu0
    %v1475 = vpop.f32.mrb[0].mxu0
    %v1476 = vadd.f32 0.0, %v1475
    %v1477 = vpop.f32.mrb[0].mxu0
    %1478 = vdwg.mxu0
    %v1479 = vadd.f32 %v1290, %v1465
    %v1480 = vadd.f32 %v1293, %v1468
    %v1481 = vadd.f32 %v1298, %v1473
    %v1482 = vadd.f32 %v1301, %v1476
    %1487 = vrot.lane.b32.xlu0 %v906, 32
    %v1488 = vpop.permute.xlu0 %1487
    %1489 = vrot.lane.b32.xlu0 %v909, 32
    %v1490 = vpop.permute.xlu0 %1489
    %1491 = vrot.lane.b32.xlu0 %v914, 32
    %v1492 = vpop.permute.xlu0 %1491
    %1493 = vrot.lane.b32.xlu0 %v917, 32
    %v1494 = vpop.permute.xlu0 %1493
    %1503 = vrot.lane.b32.xlu0 %v922, 64
    %v1504 = vpop.permute.xlu0 %1503
    %1505 = vrot.lane.b32.xlu0 %v925, 64
    %v1506 = vpop.permute.xlu0 %1505
    %1507 = vrot.lane.b32.xlu0 %v930, 64
    %v1508 = vpop.permute.xlu0 %1507
    %1509 = vrot.lane.b32.xlu0 %v933, 64
    %v1510 = vpop.permute.xlu0 %1509
    %1519 = vrot.lane.b32.xlu0 %v938, 96
    %v1520 = vpop.permute.xlu0 %1519
    %1521 = vrot.lane.b32.xlu0 %v941, 96
    %v1522 = vpop.permute.xlu0 %1521
    %1523 = vrot.lane.b32.xlu0 %v946, 96
    %v1524 = vpop.permute.xlu0 %1523
    %1525 = vrot.lane.b32.xlu0 %v949, 96
    %v1526 = vpop.permute.xlu0 %1525
    %v1531 = vsel %vm62, %v890, %v1488
    %v1532 = vsel %vm62, %v893, %v1490
    %v1533 = vsel %vm62, %v898, %v1492
    %v1534 = vsel %vm62, %v901, %v1494
    %v1535 = vsel %vm1004, %v1531, %v1504
    %v1536 = vsel %vm1004, %v1532, %v1506
    %v1537 = vsel %vm1004, %v1533, %v1508
    %v1538 = vsel %vm1004, %v1534, %v1510
    %v1539 = vsel %vm1009, %v1535, %v1520
    %v1540 = vsel %vm1009, %v1536, %v1522
    %v1541 = vsel %vm1009, %v1537, %v1524
    %v1542 = vsel %vm1009, %v1538, %v1526
    %v1543 = vpack.c.bf16 %v1540, %v1539
    %v1544 = vpack.c.bf16 %v1542, %v1541
    %v1545 = vld [vmem:[%s1 + $0xd0] sm:$0xf]
    %v1546 = vld [vmem:[%s1 + $0xd4] sm:$0xf]
    %v1547 = vld [vmem:[%s1 + $0xd8] sm:$0xf]
    %v1548 = vld [vmem:[%s1 + $0xdc] sm:$0xf]
    %v1549 = vld [vmem:[%s1 + $0xe0] sm:$0xf]
    %v1550 = vld [vmem:[%s1 + $0xe4] sm:$0xf]
    %v1551 = vld [vmem:[%s1 + $0xe8] sm:$0xf]
    %v1552 = vld [vmem:[%s1 + $0xec] sm:$0xf]
    %v1553 = vld [vmem:[%s1 + $0xf0] sm:$0xf]
    %v1554 = vld [vmem:[%s1 + $0xf4] sm:$0xf]
    %v1555 = vld [vmem:[%s1 + $0xf8] sm:$0xf]
    %v1556 = vld [vmem:[%s1 + $0xfc] sm:$0xf]
    %v1557 = vld [vmem:[%s1 + $0x100] sm:$0xf]
    %v1558 = vld [vmem:[%s1 + $0x104] sm:$0xf]
    %v1559 = vld [vmem:[%s1 + $0x108] sm:$0xf]
    %v1560 = vld [vmem:[%s1 + $0x10c] sm:$0xf]
    %v1577 = vunpack.c.l.b16 %v1545
    %v1578 = vunpack.c.l.b16 %v1546
    %v1579 = vunpack.c.l.b16 %v1547
    %v1580 = vunpack.c.l.b16 %v1548
    %v1581 = vunpack.c.l.b16 %v1549
    %v1582 = vunpack.c.l.b16 %v1550
    %v1583 = vunpack.c.l.b16 %v1551
    %v1584 = vunpack.c.l.b16 %v1552
    %v1585 = vunpack.c.l.b16 %v1553
    %v1586 = vunpack.c.l.b16 %v1554
    %v1587 = vunpack.c.l.b16 %v1555
    %v1588 = vunpack.c.l.b16 %v1556
    %v1589 = vunpack.c.l.b16 %v1557
    %v1590 = vunpack.c.l.b16 %v1558
    %v1591 = vunpack.c.l.b16 %v1559
    %v1592 = vunpack.c.l.b16 %v1560
    %v1593 = vpack.c.b16 %v1578, %v1577
    %v1594 = vpack.c.b16 %v1580, %v1579
    %v1595 = vpack.c.b16 %v1582, %v1581
    %v1596 = vpack.c.b16 %v1584, %v1583
    %v1597 = vpack.c.b16 %v1586, %v1585
    %v1598 = vpack.c.b16 %v1588, %v1587
    %v1599 = vpack.c.b16 %v1590, %v1589
    %v1600 = vpack.c.b16 %v1592, %v1591
    %1609 = vmatprep.subr.bf16.mxu0 0
    %1610 = vmatpush1.bf16.msra.mxu0 %v1593
    %1611 = vmatprep.subr.bf16.mxu0 0
    %1612 = vmatpush1.bf16.msra.mxu0 %v1594
    %1613 = vmatprep.subr.bf16.mxu0 0
    %1614 = vmatpush1.bf16.msra.mxu0 %v1595
    %1615 = vmatprep.subr.bf16.mxu0 0
    %1616 = vmatpush1.bf16.msra.mxu0 %v1596
    %1617 = vmatprep.subr.bf16.mxu0 0
    %1618 = vmatpush1.bf16.msra.mxu0 %v1597
    %1619 = vmatprep.subr.bf16.mxu0 0
    %1620 = vmatpush1.bf16.msra.mxu0 %v1598
    %1621 = vmatprep.subr.bf16.mxu0 0
    %1622 = vmatpush1.bf16.msra.mxu0 %v1599
    %1623 = vmatprep.subr.bf16.mxu0 0
    %1624 = vmatpush1.bf16.msra.mxu0 %v1600
    %1625 = vmatprep.subr.bf16.mxu0 0
    %1626 = vmatpush1.bf16.msra.mxu0 0
    %1627 = vmatprep.subr.bf16.mxu0 0
    %1628 = vmatpush1.bf16.msra.mxu0 0
    %1629 = vmatprep.subr.bf16.mxu0 0
    %1630 = vmatpush1.bf16.msra.mxu0 0
    %1631 = vmatprep.subr.bf16.mxu0 0
    %1632 = vmatpush1.bf16.msra.mxu0 0
    %1633 = vmatprep.subr.bf16.mxu0 0
    %1634 = vmatpush1.bf16.msra.mxu0 0
    %1635 = vmatprep.subr.bf16.mxu0 0
    %1636 = vmatpush1.bf16.msra.mxu0 0
    %1637 = vmatprep.subr.bf16.mxu0 0
    %1638 = vmatpush1.bf16.msra.mxu0 0
    %1639 = vmatprep.subr.bf16.mxu0 0
    %1640 = vmatpush1.bf16.msra.mxu0 0
    %1641 = vmatprep.mubr.bf16.mxu0 0
    %1642 = vmatmul.mubr.bf16.gmra.mrb[0].mxu0 %v1543
    %v1643 = vpop.f32.mrb[0].mxu0
    %v1644 = vadd.f32 0.0, %v1643
    %v1645 = vpop.f32.mrb[0].mxu0
    %v1646 = vpop.f32.mrb[0].mxu0
    %v1647 = vadd.f32 0.0, %v1646
    %v1648 = vpop.f32.mrb[0].mxu0
    %1649 = vmatprep.mubr.bf16.mxu0 0
    %1650 = vmatmul.mubr.bf16.gmra.mrb[0].mxu0 %v1544
    %v1651 = vpop.f32.mrb[0].mxu0
    %v1652 = vadd.f32 0.0, %v1651
    %v1653 = vpop.f32.mrb[0].mxu0
    %v1654 = vpop.f32.mrb[0].mxu0
    %v1655 = vadd.f32 0.0, %v1654
    %v1656 = vpop.f32.mrb[0].mxu0
    %1657 = vdwg.mxu0
    %v1658 = vadd.f32 %v1479, %v1644
    %v1659 = vadd.f32 %v1480, %v1647
    %v1660 = vadd.f32 %v1481, %v1652
    %v1661 = vadd.f32 %v1482, %v1655
    %v1662 = vlaneseq
    %v1663 = vshrl.u32 %v1662, 7
    %v1664 = vsub.s32 3, %v1663
    %v1665 = vrot.slane %v16, %v1664
    %v1666 = vadd.f32 %v1658, %v1665
    %v1667 = vadd.f32 %v1659, %v1665
    %v1668 = vadd.f32 %v1660, %v1665
    %v1669 = vadd.f32 %v1661, %v1665
    %vm1670 = vcmp.gt.f32.partialorder %v1666, 0.0
    %vm1671 = vcmp.gt.f32.partialorder %v1667, 0.0
    %vm1672 = vcmp.gt.f32.partialorder %v1668, 0.0
    %vm1673 = vcmp.gt.f32.partialorder %v1669, 0.0
    %v1674 = vmul.f32 %v1666, 0.01
    %v1675 = vmul.f32 %v1667, 0.01
    %v1676 = vmul.f32 %v1668, 0.01
    %v1677 = vmul.f32 %v1669, 0.01
    %v1678 = vsel %vm1670, %v1666, %v1674
    %v1679 = vsel %vm1671, %v1667, %v1675
    %v1680 = vsel %vm1672, %v1668, %v1676
    %v1681 = vsel %vm1673, %v1669, %v1677
    %v1682 = vsel %vm62, %v1678, 0.0
    %v1683 = vsel %vm62, %v1679, 0.0
    %v1684 = vadd.f32 %v1682, %v1683
    %v1685 = vsel %vm62, %v1680, 0.0
    %v1686 = vadd.f32 %v1684, %v1685
    %v1687 = vsel %vm62, %v1681, 0.0
    %v1688 = vadd.f32 %v1686, %v1687
    %v1689 = vrot.slane %v1688, 4
    %v1690 = vadd.f32 %v1688, %v1689
    %v1691 = vrot.slane %v1690, 2
    %v1692 = vadd.f32 %v1690, %v1691
    %v1693 = vrot.slane %v1692, 1
    %v1694 = vadd.f32 %v1692, %v1693
    %v1695 = vrcp.pop 32.0
    %v1696 = vmul.f32 %v1694, %v1695
    %v1697 = vsub.f32 %v1678, %v1696
    %v1698 = vsub.f32 %v1679, %v1696
    %v1699 = vsub.f32 %v1680, %v1696
    %v1700 = vsub.f32 %v1681, %v1696
    %v1701 = vmul.f32 %v1697, %v1697
    %v1702 = vmul.f32 %v1698, %v1698
    %v1703 = vmul.f32 %v1699, %v1699
    %v1704 = vmul.f32 %v1700, %v1700
    %v1705 = vsel %vm62, %v1701, 0.0
    %v1706 = vsel %vm62, %v1702, 0.0
    %v1707 = vadd.f32 %v1705, %v1706
    %v1708 = vsel %vm62, %v1703, 0.0
    %v1709 = vadd.f32 %v1707, %v1708
    %v1710 = vsel %vm62, %v1704, 0.0
    %v1711 = vadd.f32 %v1709, %v1710
    %v1712 = vrot.slane %v1711, 4
    %v1713 = vadd.f32 %v1711, %v1712
    %v1714 = vrot.slane %v1713, 2
    %v1715 = vadd.f32 %v1713, %v1714
    %v1716 = vrot.slane %v1715, 1
    %v1717 = vadd.f32 %v1715, %v1716
    %v1718 = vmul.f32 %v1717, %v1695
    %v1719 = vadd.f32 %v1718, 1e-05
    %v1720 = vrsqrt.pop %v1719
    %v1721 = vmul.f32 %v1697, %v1720
    %v1722 = vmul.f32 %v1698, %v1720
    %v1723 = vmul.f32 %v1699, %v1720
    %v1724 = vmul.f32 %v1700, %v1720
    %v1725 = vlaneseq
    %v1726 = vshrl.u32 %v1725, 7
    %v1727 = vsub.s32 4, %v1726
    %v1728 = vrot.slane %v16, %v1727
    %v1729 = vmul.f32 %v1721, %v1728
    %v1730 = vmul.f32 %v1722, %v1728
    %v1731 = vmul.f32 %v1723, %v1728
    %v1732 = vmul.f32 %v1724, %v1728
    %v1733 = vlaneseq
    %v1734 = vshrl.u32 %v1733, 7
    %v1735 = vsub.s32 5, %v1734
    %v1736 = vrot.slane %v16, %v1735
    %v1737 = vadd.f32 %v1729, %v1736
    %v1738 = vadd.f32 %v1730, %v1736
    %v1739 = vadd.f32 %v1731, %v1736
    %v1740 = vadd.f32 %v1732, %v1736
    %v1741 = vld [vmem:[%s1 + $0x210] sm:$0xf]
    %v1742 = vld [vmem:[%s1 + $0x214] sm:$0xf]
    %v1743 = vld [vmem:[%s1 + $0x218] sm:$0xf]
    %v1744 = vld [vmem:[%s1 + $0x21c] sm:$0xf]
    %v1745 = vld [vmem:[%s1 + $0x220] sm:$0xf]
    %v1746 = vld [vmem:[%s1 + $0x224] sm:$0xf]
    %v1747 = vld [vmem:[%s1 + $0x228] sm:$0xf]
    %v1748 = vld [vmem:[%s1 + $0x22c] sm:$0xf]
    %v1749 = vld [vmem:[%s1 + $0x230] sm:$0xf]
    %v1750 = vld [vmem:[%s1 + $0x234] sm:$0xf]
    %v1751 = vld [vmem:[%s1 + $0x238] sm:$0xf]
    %v1752 = vld [vmem:[%s1 + $0x23c] sm:$0xf]
    %v1753 = vld [vmem:[%s1 + $0x240] sm:$0xf]
    %v1754 = vld [vmem:[%s1 + $0x244] sm:$0xf]
    %v1755 = vld [vmem:[%s1 + $0x248] sm:$0xf]
    %v1756 = vld [vmem:[%s1 + $0x24c] sm:$0xf]
    %v1757 = vpack.c.bf16 %v1738, %v1737
    %v1758 = vpack.c.bf16 %v1740, %v1739
    %v1775 = vunpack.c.l.b16 %v1741
    %v1776 = vunpack.c.l.b16 %v1742
    %v1777 = vunpack.c.l.b16 %v1743
    %v1778 = vunpack.c.l.b16 %v1744
    %v1779 = vunpack.c.l.b16 %v1745
    %v1780 = vunpack.c.l.b16 %v1746
    %v1781 = vunpack.c.l.b16 %v1747
    %v1782 = vunpack.c.l.b16 %v1748
    %v1783 = vunpack.c.l.b16 %v1749
    %v1784 = vunpack.c.l.b16 %v1750
    %v1785 = vunpack.c.l.b16 %v1751
    %v1786 = vunpack.c.l.b16 %v1752
    %v1787 = vunpack.c.l.b16 %v1753
    %v1788 = vunpack.c.l.b16 %v1754
    %v1789 = vunpack.c.l.b16 %v1755
    %v1790 = vunpack.c.l.b16 %v1756
    %v1791 = vpack.c.b16 %v1776, %v1775
    %v1792 = vpack.c.b16 %v1778, %v1777
    %v1793 = vpack.c.b16 %v1780, %v1779
    %v1794 = vpack.c.b16 %v1782, %v1781
    %v1795 = vpack.c.b16 %v1784, %v1783
    %v1796 = vpack.c.b16 %v1786, %v1785
    %v1797 = vpack.c.b16 %v1788, %v1787
    %v1798 = vpack.c.b16 %v1790, %v1789
    %v1800 = vsel %vm62, %v1791, 0
    %v1803 = vsel %vm62, %v1792, 0
    %v1806 = vsel %vm62, %v1793, 0
    %v1809 = vsel %vm62, %v1794, 0
    %v1812 = vsel %vm62, %v1795, 0
    %v1815 = vsel %vm62, %v1796, 0
    %v1818 = vsel %vm62, %v1797, 0
    %v1821 = vsel %vm62, %v1798, 0
    %1823 = vmatprep.subr.bf16.mxu0 0
    %1824 = vmatpush1.bf16.msra.mxu0 %v1757
    %1825 = vmatprep.subr.bf16.mxu0 0
    %1826 = vmatpush1.bf16.msra.mxu0 %v1758
    %1827 = vmatprep.subr.bf16.mxu0 0
    %1828 = vmatpush1.bf16.msra.mxu0 0
    %1829 = vmatprep.subr.bf16.mxu0 0
    %1830 = vmatpush1.bf16.msra.mxu0 0
    %1831 = vmatprep.subr.bf16.mxu0 0
    %1832 = vmatpush1.bf16.msra.mxu0 0
    %1833 = vmatprep.subr.bf16.mxu0 0
    %1834 = vmatpush1.bf16.msra.mxu0 0
    %1835 = vmatprep.subr.bf16.mxu0 0
    %1836 = vmatpush1.bf16.msra.mxu0 0
    %1837 = vmatprep.subr.bf16.mxu0 0
    %1838 = vmatpush1.bf16.msra.mxu0 0
    %1839 = vmatprep.subr.bf16.mxu0 0
    %1840 = vmatpush1.bf16.msra.mxu0 0
    %1841 = vmatprep.subr.bf16.mxu0 0
    %1842 = vmatpush1.bf16.msra.mxu0 0
    %1843 = vmatprep.subr.bf16.mxu0 0
    %1844 = vmatpush1.bf16.msra.mxu0 0
    %1845 = vmatprep.subr.bf16.mxu0 0
    %1846 = vmatpush1.bf16.msra.mxu0 0
    %1847 = vmatprep.subr.bf16.mxu0 0
    %1848 = vmatpush1.bf16.msra.mxu0 0
    %1849 = vmatprep.subr.bf16.mxu0 0
    %1850 = vmatpush1.bf16.msra.mxu0 0
    %1851 = vmatprep.subr.bf16.mxu0 0
    %1852 = vmatpush1.bf16.msra.mxu0 0
    %1853 = vmatprep.subr.bf16.mxu0 0
    %1854 = vmatpush1.bf16.msra.mxu0 0
    %1855 = vmatprep.mubr.bf16.mxu0 0
    %1856 = vmatmul.mubr.bf16.gmra.mrb[0].mxu0 %v1800
    %v1857 = vpop.f32.mrb[0].mxu0
    %v1858 = vadd.f32 0.0, %v1857
    %v1859 = vpop.f32.mrb[0].mxu0
    %v1860 = vpop.f32.mrb[0].mxu0
    %v1861 = vadd.f32 0.0, %v1860
    %v1862 = vpop.f32.mrb[0].mxu0
    %1863 = vmatprep.mubr.bf16.mxu0 0
    %1864 = vmatmul.mubr.bf16.gmra.mrb[0].mxu0 %v1803
    %v1865 = vpop.f32.mrb[0].mxu0
    %v1866 = vadd.f32 0.0, %v1865
    %v1867 = vpop.f32.mrb[0].mxu0
    %v1868 = vpop.f32.mrb[0].mxu0
    %v1869 = vadd.f32 0.0, %v1868
    %v1870 = vpop.f32.mrb[0].mxu0
    %1871 = vmatprep.mubr.bf16.mxu0 0
    %1872 = vmatmul.mubr.bf16.gmra.mrb[0].mxu0 %v1806
    %v1873 = vpop.f32.mrb[0].mxu0
    %v1874 = vadd.f32 0.0, %v1873
    %v1875 = vpop.f32.mrb[0].mxu0
    %v1876 = vpop.f32.mrb[0].mxu0
    %v1877 = vadd.f32 0.0, %v1876
    %v1878 = vpop.f32.mrb[0].mxu0
    %1879 = vmatprep.mubr.bf16.mxu0 0
    %1880 = vmatmul.mubr.bf16.gmra.mrb[0].mxu0 %v1809
    %v1881 = vpop.f32.mrb[0].mxu0
    %v1882 = vadd.f32 0.0, %v1881
    %v1883 = vpop.f32.mrb[0].mxu0
    %v1884 = vpop.f32.mrb[0].mxu0
    %v1885 = vadd.f32 0.0, %v1884
    %v1886 = vpop.f32.mrb[0].mxu0
    %1887 = vmatprep.mubr.bf16.mxu0 0
    %1888 = vmatmul.mubr.bf16.gmra.mrb[0].mxu0 %v1812
    %v1889 = vpop.f32.mrb[0].mxu0
    %v1890 = vadd.f32 0.0, %v1889
    %v1891 = vpop.f32.mrb[0].mxu0
    %v1892 = vpop.f32.mrb[0].mxu0
    %v1893 = vadd.f32 0.0, %v1892
    %v1894 = vpop.f32.mrb[0].mxu0
    %1895 = vmatprep.mubr.bf16.mxu0 0
    %1896 = vmatmul.mubr.bf16.gmra.mrb[0].mxu0 %v1815
    %v1897 = vpop.f32.mrb[0].mxu0
    %v1898 = vadd.f32 0.0, %v1897
    %v1899 = vpop.f32.mrb[0].mxu0
    %v1900 = vpop.f32.mrb[0].mxu0
    %v1901 = vadd.f32 0.0, %v1900
    %v1902 = vpop.f32.mrb[0].mxu0
    %1903 = vmatprep.mubr.bf16.mxu0 0
    %1904 = vmatmul.mubr.bf16.gmra.mrb[0].mxu0 %v1818
    %v1905 = vpop.f32.mrb[0].mxu0
    %v1906 = vadd.f32 0.0, %v1905
    %v1907 = vpop.f32.mrb[0].mxu0
    %v1908 = vpop.f32.mrb[0].mxu0
    %v1909 = vadd.f32 0.0, %v1908
    %v1910 = vpop.f32.mrb[0].mxu0
    %1911 = vmatprep.mubr.bf16.mxu0 0
    %1912 = vmatmul.mubr.bf16.gmra.mrb[0].mxu0 %v1821
    %v1913 = vpop.f32.mrb[0].mxu0
    %v1914 = vadd.f32 0.0, %v1913
    %v1915 = vpop.f32.mrb[0].mxu0
    %v1916 = vpop.f32.mrb[0].mxu0
    %v1917 = vadd.f32 0.0, %v1916
    %v1918 = vpop.f32.mrb[0].mxu0
    %1919 = vdwg.mxu0
    %1921 = vrot.lane.b32.xlu0 %v1861, 32
    %v1922 = vpop.permute.xlu0 %1921
    %1925 = vrot.lane.b32.xlu0 %v1866, 64
    %v1926 = vpop.permute.xlu0 %1925
    %1929 = vrot.lane.b32.xlu0 %v1869, 96
    %v1930 = vpop.permute.xlu0 %1929
    %v1932 = vsel %vm62, %v1858, %v1922
    %v1933 = vsel %vm1004, %v1932, %v1926
    %v1934 = vsel %vm1009, %v1933, %v1930
    %v1935 = vpack.c.bf16 %v1934, %v1934
    %v1936 = vld [vmem:[%s1 + $0x110] sm:$0xf]
    %v1937 = vld [vmem:[%s1 + $0x114] sm:$0xf]
    %v1938 = vld [vmem:[%s1 + $0x118] sm:$0xf]
    %v1939 = vld [vmem:[%s1 + $0x11c] sm:$0xf]
    %v1940 = vld [vmem:[%s1 + $0x120] sm:$0xf]
    %v1941 = vld [vmem:[%s1 + $0x124] sm:$0xf]
    %v1942 = vld [vmem:[%s1 + $0x128] sm:$0xf]
    %v1943 = vld [vmem:[%s1 + $0x12c] sm:$0xf]
    %v1944 = vld [vmem:[%s1 + $0x130] sm:$0xf]
    %v1945 = vld [vmem:[%s1 + $0x134] sm:$0xf]
    %v1946 = vld [vmem:[%s1 + $0x138] sm:$0xf]
    %v1947 = vld [vmem:[%s1 + $0x13c] sm:$0xf]
    %v1948 = vld [vmem:[%s1 + $0x140] sm:$0xf]
    %v1949 = vld [vmem:[%s1 + $0x144] sm:$0xf]
    %v1950 = vld [vmem:[%s1 + $0x148] sm:$0xf]
    %v1951 = vld [vmem:[%s1 + $0x14c] sm:$0xf]
    %1953 = vrot.lane.b32.xlu0 %v1877, 32
    %v1954 = vpop.permute.xlu0 %1953
    %1957 = vrot.lane.b32.xlu0 %v1882, 64
    %v1958 = vpop.permute.xlu0 %1957
    %1961 = vrot.lane.b32.xlu0 %v1885, 96
    %v1962 = vpop.permute.xlu0 %1961
    %v1964 = vsel %vm62, %v1874, %v1954
    %v1965 = vsel %vm1004, %v1964, %v1958
    %v1966 = vsel %vm1009, %v1965, %v1962
    %v1967 = vpack.c.bf16 %v1966, %v1966
    %v1968 = vld [vmem:[%s1 + $0x150] sm:$0xf]
    %v1969 = vld [vmem:[%s1 + $0x154] sm:$0xf]
    %v1970 = vld [vmem:[%s1 + $0x158] sm:$0xf]
    %v1971 = vld [vmem:[%s1 + $0x15c] sm:$0xf]
    %v1972 = vld [vmem:[%s1 + $0x160] sm:$0xf]
    %v1973 = vld [vmem:[%s1 + $0x164] sm:$0xf]
    %v1974 = vld [vmem:[%s1 + $0x168] sm:$0xf]
    %v1975 = vld [vmem:[%s1 + $0x16c] sm:$0xf]
    %v1976 = vld [vmem:[%s1 + $0x170] sm:$0xf]
    %v1977 = vld [vmem:[%s1 + $0x174] sm:$0xf]
    %v1978 = vld [vmem:[%s1 + $0x178] sm:$0xf]
    %v1979 = vld [vmem:[%s1 + $0x17c] sm:$0xf]
    %v1980 = vld [vmem:[%s1 + $0x180] sm:$0xf]
    %v1981 = vld [vmem:[%s1 + $0x184] sm:$0xf]
    %v1982 = vld [vmem:[%s1 + $0x188] sm:$0xf]
    %v1983 = vld [vmem:[%s1 + $0x18c] sm:$0xf]
    %v2000 = vunpack.c.l.b16 %v1968
    %v2001 = vunpack.c.l.b16 %v1969
    %v2002 = vunpack.c.l.b16 %v1970
    %v2003 = vunpack.c.l.b16 %v1971
    %v2004 = vunpack.c.l.b16 %v1972
    %v2005 = vunpack.c.l.b16 %v1973
    %v2006 = vunpack.c.l.b16 %v1974
    %v2007 = vunpack.c.l.b16 %v1975
    %v2008 = vunpack.c.l.b16 %v1976
    %v2009 = vunpack.c.l.b16 %v1977
    %v2010 = vunpack.c.l.b16 %v1978
    %v2011 = vunpack.c.l.b16 %v1979
    %v2012 = vunpack.c.l.b16 %v1980
    %v2013 = vunpack.c.l.b16 %v1981
    %v2014 = vunpack.c.l.b16 %v1982
    %v2015 = vunpack.c.l.b16 %v1983
    %v2016 = vpack.c.b16 %v2001, %v2000
    %v2017 = vpack.c.b16 %v2003, %v2002
    %v2018 = vpack.c.b16 %v2005, %v2004
    %v2019 = vpack.c.b16 %v2007, %v2006
    %v2020 = vpack.c.b16 %v2009, %v2008
    %v2021 = vpack.c.b16 %v2011, %v2010
    %v2022 = vpack.c.b16 %v2013, %v2012
    %v2023 = vpack.c.b16 %v2015, %v2014
    %2032 = vmatprep.subr.bf16.mxu0 0
    %2033 = vmatpush1.bf16.msra.mxu0 %v2016
    %2034 = vmatprep.subr.bf16.mxu0 0
    %2035 = vmatpush1.bf16.msra.mxu0 %v2017
    %2036 = vmatprep.subr.bf16.mxu0 0
    %2037 = vmatpush1.bf16.msra.mxu0 %v2018
    %2038 = vmatprep.subr.bf16.mxu0 0
    %2039 = vmatpush1.bf16.msra.mxu0 %v2019
    %2040 = vmatprep.subr.bf16.mxu0 0
    %2041 = vmatpush1.bf16.msra.mxu0 %v2020
    %2042 = vmatprep.subr.bf16.mxu0 0
    %2043 = vmatpush1.bf16.msra.mxu0 %v2021
    %2044 = vmatprep.subr.bf16.mxu0 0
    %2045 = vmatpush1.bf16.msra.mxu0 %v2022
    %2046 = vmatprep.subr.bf16.mxu0 0
    %2047 = vmatpush1.bf16.msra.mxu0 %v2023
    %2048 = vmatprep.subr.bf16.mxu0 0
    %2049 = vmatpush1.bf16.msra.mxu0 0
    %2050 = vmatprep.subr.bf16.mxu0 0
    %2051 = vmatpush1.bf16.msra.mxu0 0
    %2052 = vmatprep.subr.bf16.mxu0 0
    %2053 = vmatpush1.bf16.msra.mxu0 0
    %2054 = vmatprep.subr.bf16.mxu0 0
    %2055 = vmatpush1.bf16.msra.mxu0 0
    %2056 = vmatprep.subr.bf16.mxu0 0
    %2057 = vmatpush1.bf16.msra.mxu0 0
    %2058 = vmatprep.subr.bf16.mxu0 0
    %2059 = vmatpush1.bf16.msra.mxu0 0
    %2060 = vmatprep.subr.bf16.mxu0 0
    %2061 = vmatpush1.bf16.msra.mxu0 0
    %2062 = vmatprep.subr.bf16.mxu0 0
    %2063 = vmatpush1.bf16.msra.mxu0 0
    %2064 = vmatprep.mubr.bf16.mxu0 0
    %2065 = vmatmul.mubr.bf16.gmra.mrb[0].mxu0 %v1967
    %v2066 = vpop.f32.mrb[0].mxu0
    %v2067 = vadd.f32 0.0, %v2066
    %v2068 = vpop.f32.mrb[0].mxu0
    %v2069 = vpop.f32.mrb[0].mxu0
    %v2070 = vpop.f32.mrb[0].mxu0
    %2071 = vdwg.mxu0
    %v2088 = vunpack.c.l.b16 %v1936
    %v2089 = vunpack.c.l.b16 %v1937
    %v2090 = vunpack.c.l.b16 %v1938
    %v2091 = vunpack.c.l.b16 %v1939
    %v2092 = vunpack.c.l.b16 %v1940
    %v2093 = vunpack.c.l.b16 %v1941
    %v2094 = vunpack.c.l.b16 %v1942
    %v2095 = vunpack.c.l.b16 %v1943
    %v2096 = vunpack.c.l.b16 %v1944
    %v2097 = vunpack.c.l.b16 %v1945
    %v2098 = vunpack.c.l.b16 %v1946
    %v2099 = vunpack.c.l.b16 %v1947
    %v2100 = vunpack.c.l.b16 %v1948
    %v2101 = vunpack.c.l.b16 %v1949
    %v2102 = vunpack.c.l.b16 %v1950
    %v2103 = vunpack.c.l.b16 %v1951
    %v2104 = vpack.c.b16 %v2089, %v2088
    %v2105 = vpack.c.b16 %v2091, %v2090
    %v2106 = vpack.c.b16 %v2093, %v2092
    %v2107 = vpack.c.b16 %v2095, %v2094
    %v2108 = vpack.c.b16 %v2097, %v2096
    %v2109 = vpack.c.b16 %v2099, %v2098
    %v2110 = vpack.c.b16 %v2101, %v2100
    %v2111 = vpack.c.b16 %v2103, %v2102
    %2120 = vmatprep.subr.bf16.mxu0 0
    %2121 = vmatpush1.bf16.msra.mxu0 %v2104
    %2122 = vmatprep.subr.bf16.mxu0 0
    %2123 = vmatpush1.bf16.msra.mxu0 %v2105
    %2124 = vmatprep.subr.bf16.mxu0 0
    %2125 = vmatpush1.bf16.msra.mxu0 %v2106
    %2126 = vmatprep.subr.bf16.mxu0 0
    %2127 = vmatpush1.bf16.msra.mxu0 %v2107
    %2128 = vmatprep.subr.bf16.mxu0 0
    %2129 = vmatpush1.bf16.msra.mxu0 %v2108
    %2130 = vmatprep.subr.bf16.mxu0 0
    %2131 = vmatpush1.bf16.msra.mxu0 %v2109
    %2132 = vmatprep.subr.bf16.mxu0 0
    %2133 = vmatpush1.bf16.msra.mxu0 %v2110
    %2134 = vmatprep.subr.bf16.mxu0 0
    %2135 = vmatpush1.bf16.msra.mxu0 %v2111
    %2136 = vmatprep.subr.bf16.mxu0 0
    %2137 = vmatpush1.bf16.msra.mxu0 0
    %2138 = vmatprep.subr.bf16.mxu0 0
    %2139 = vmatpush1.bf16.msra.mxu0 0
    %2140 = vmatprep.subr.bf16.mxu0 0
    %2141 = vmatpush1.bf16.msra.mxu0 0
    %2142 = vmatprep.subr.bf16.mxu0 0
    %2143 = vmatpush1.bf16.msra.mxu0 0
    %2144 = vmatprep.subr.bf16.mxu0 0
    %2145 = vmatpush1.bf16.msra.mxu0 0
    %2146 = vmatprep.subr.bf16.mxu0 0
    %2147 = vmatpush1.bf16.msra.mxu0 0
    %2148 = vmatprep.subr.bf16.mxu0 0
    %2149 = vmatpush1.bf16.msra.mxu0 0
    %2150 = vmatprep.subr.bf16.mxu0 0
    %2151 = vmatpush1.bf16.msra.mxu0 0
    %2152 = vmatprep.mubr.bf16.mxu0 0
    %2153 = vmatmul.mubr.bf16.gmra.mrb[0].mxu0 %v1935
    %v2154 = vpop.f32.mrb[0].mxu0
    %v2155 = vadd.f32 %v2067, %v2154
    %v2156 = vpop.f32.mrb[0].mxu0
    %v2157 = vpop.f32.mrb[0].mxu0
    %v2158 = vpop.f32.mrb[0].mxu0
    %2159 = vdwg.mxu0
    %2161 = vrot.lane.b32.xlu0 %v1893, 32
    %v2162 = vpop.permute.xlu0 %2161
    %2165 = vrot.lane.b32.xlu0 %v1898, 64
    %v2166 = vpop.permute.xlu0 %2165
    %2169 = vrot.lane.b32.xlu0 %v1901, 96
    %v2170 = vpop.permute.xlu0 %2169
    %v2172 = vsel %vm62, %v1890, %v2162
    %v2173 = vsel %vm1004, %v2172, %v2166
    %v2174 = vsel %vm1009, %v2173, %v2170
    %v2175 = vpack.c.bf16 %v2174, %v2174
    %v2176 = vld [vmem:[%s1 + $0x190] sm:$0xf]
    %v2177 = vld [vmem:[%s1 + $0x194] sm:$0xf]
    %v2178 = vld [vmem:[%s1 + $0x198] sm:$0xf]
    %v2179 = vld [vmem:[%s1 + $0x19c] sm:$0xf]
    %v2180 = vld [vmem:[%s1 + $0x1a0] sm:$0xf]
    %v2181 = vld [vmem:[%s1 + $0x1a4] sm:$0xf]
    %v2182 = vld [vmem:[%s1 + $0x1a8] sm:$0xf]
    %v2183 = vld [vmem:[%s1 + $0x1ac] sm:$0xf]
    %v2184 = vld [vmem:[%s1 + $0x1b0] sm:$0xf]
    %v2185 = vld [vmem:[%s1 + $0x1b4] sm:$0xf]
    %v2186 = vld [vmem:[%s1 + $0x1b8] sm:$0xf]
    %v2187 = vld [vmem:[%s1 + $0x1bc] sm:$0xf]
    %v2188 = vld [vmem:[%s1 + $0x1c0] sm:$0xf]
    %v2189 = vld [vmem:[%s1 + $0x1c4] sm:$0xf]
    %v2190 = vld [vmem:[%s1 + $0x1c8] sm:$0xf]
    %v2191 = vld [vmem:[%s1 + $0x1cc] sm:$0xf]
    %v2208 = vunpack.c.l.b16 %v2176
    %v2209 = vunpack.c.l.b16 %v2177
    %v2210 = vunpack.c.l.b16 %v2178
    %v2211 = vunpack.c.l.b16 %v2179
    %v2212 = vunpack.c.l.b16 %v2180
    %v2213 = vunpack.c.l.b16 %v2181
    %v2214 = vunpack.c.l.b16 %v2182
    %v2215 = vunpack.c.l.b16 %v2183
    %v2216 = vunpack.c.l.b16 %v2184
    %v2217 = vunpack.c.l.b16 %v2185
    %v2218 = vunpack.c.l.b16 %v2186
    %v2219 = vunpack.c.l.b16 %v2187
    %v2220 = vunpack.c.l.b16 %v2188
    %v2221 = vunpack.c.l.b16 %v2189
    %v2222 = vunpack.c.l.b16 %v2190
    %v2223 = vunpack.c.l.b16 %v2191
    %v2224 = vpack.c.b16 %v2209, %v2208
    %v2225 = vpack.c.b16 %v2211, %v2210
    %v2226 = vpack.c.b16 %v2213, %v2212
    %v2227 = vpack.c.b16 %v2215, %v2214
    %v2228 = vpack.c.b16 %v2217, %v2216
    %v2229 = vpack.c.b16 %v2219, %v2218
    %v2230 = vpack.c.b16 %v2221, %v2220
    %v2231 = vpack.c.b16 %v2223, %v2222
    %2240 = vmatprep.subr.bf16.mxu0 0
    %2241 = vmatpush1.bf16.msra.mxu0 %v2224
    %2242 = vmatprep.subr.bf16.mxu0 0
    %2243 = vmatpush1.bf16.msra.mxu0 %v2225
    %2244 = vmatprep.subr.bf16.mxu0 0
    %2245 = vmatpush1.bf16.msra.mxu0 %v2226
    %2246 = vmatprep.subr.bf16.mxu0 0
    %2247 = vmatpush1.bf16.msra.mxu0 %v2227
    %2248 = vmatprep.subr.bf16.mxu0 0
    %2249 = vmatpush1.bf16.msra.mxu0 %v2228
    %2250 = vmatprep.subr.bf16.mxu0 0
    %2251 = vmatpush1.bf16.msra.mxu0 %v2229
    %2252 = vmatprep.subr.bf16.mxu0 0
    %2253 = vmatpush1.bf16.msra.mxu0 %v2230
    %2254 = vmatprep.subr.bf16.mxu0 0
    %2255 = vmatpush1.bf16.msra.mxu0 %v2231
    %2256 = vmatprep.subr.bf16.mxu0 0
    %2257 = vmatpush1.bf16.msra.mxu0 0
    %2258 = vmatprep.subr.bf16.mxu0 0
    %2259 = vmatpush1.bf16.msra.mxu0 0
    %2260 = vmatprep.subr.bf16.mxu0 0
    %2261 = vmatpush1.bf16.msra.mxu0 0
    %2262 = vmatprep.subr.bf16.mxu0 0
    %2263 = vmatpush1.bf16.msra.mxu0 0
    %2264 = vmatprep.subr.bf16.mxu0 0
    %2265 = vmatpush1.bf16.msra.mxu0 0
    %2266 = vmatprep.subr.bf16.mxu0 0
    %2267 = vmatpush1.bf16.msra.mxu0 0
    %2268 = vmatprep.subr.bf16.mxu0 0
    %2269 = vmatpush1.bf16.msra.mxu0 0
    %2270 = vmatprep.subr.bf16.mxu0 0
    %2271 = vmatpush1.bf16.msra.mxu0 0
    %2272 = vmatprep.mubr.bf16.mxu0 0
    %2273 = vmatmul.mubr.bf16.gmra.mrb[0].mxu0 %v2175
    %v2274 = vpop.f32.mrb[0].mxu0
    %v2275 = vadd.f32 0.0, %v2274
    %v2276 = vpop.f32.mrb[0].mxu0
    %v2277 = vpop.f32.mrb[0].mxu0
    %v2278 = vpop.f32.mrb[0].mxu0
    %2279 = vdwg.mxu0
    %v2280 = vadd.f32 %v2155, %v2275
    %2282 = vrot.lane.b32.xlu0 %v1909, 32
    %v2283 = vpop.permute.xlu0 %2282
    %2286 = vrot.lane.b32.xlu0 %v1914, 64
    %v2287 = vpop.permute.xlu0 %2286
    %2290 = vrot.lane.b32.xlu0 %v1917, 96
    %v2291 = vpop.permute.xlu0 %2290
    %v2293 = vsel %vm62, %v1906, %v2283
    %v2294 = vsel %vm1004, %v2293, %v2287
    %v2295 = vsel %vm1009, %v2294, %v2291
    %v2296 = vpack.c.bf16 %v2295, %v2295
    %v2297 = vld [vmem:[%s1 + $0x1d0] sm:$0xf]
    %v2298 = vld [vmem:[%s1 + $0x1d4] sm:$0xf]
    %v2299 = vld [vmem:[%s1 + $0x1d8] sm:$0xf]
    %v2300 = vld [vmem:[%s1 + $0x1dc] sm:$0xf]
    %v2301 = vld [vmem:[%s1 + $0x1e0] sm:$0xf]
    %v2302 = vld [vmem:[%s1 + $0x1e4] sm:$0xf]
    %v2303 = vld [vmem:[%s1 + $0x1e8] sm:$0xf]
    %v2304 = vld [vmem:[%s1 + $0x1ec] sm:$0xf]
    %v2305 = vld [vmem:[%s1 + $0x1f0] sm:$0xf]
    %v2306 = vld [vmem:[%s1 + $0x1f4] sm:$0xf]
    %v2307 = vld [vmem:[%s1 + $0x1f8] sm:$0xf]
    %v2308 = vld [vmem:[%s1 + $0x1fc] sm:$0xf]
    %v2309 = vld [vmem:[%s1 + $0x200] sm:$0xf]
    %v2310 = vld [vmem:[%s1 + $0x204] sm:$0xf]
    %v2311 = vld [vmem:[%s1 + $0x208] sm:$0xf]
    %v2312 = vld [vmem:[%s1 + $0x20c] sm:$0xf]
    %v2329 = vunpack.c.l.b16 %v2297
    %v2330 = vunpack.c.l.b16 %v2298
    %v2331 = vunpack.c.l.b16 %v2299
    %v2332 = vunpack.c.l.b16 %v2300
    %v2333 = vunpack.c.l.b16 %v2301
    %v2334 = vunpack.c.l.b16 %v2302
    %v2335 = vunpack.c.l.b16 %v2303
    %v2336 = vunpack.c.l.b16 %v2304
    %v2337 = vunpack.c.l.b16 %v2305
    %v2338 = vunpack.c.l.b16 %v2306
    %v2339 = vunpack.c.l.b16 %v2307
    %v2340 = vunpack.c.l.b16 %v2308
    %v2341 = vunpack.c.l.b16 %v2309
    %v2342 = vunpack.c.l.b16 %v2310
    %v2343 = vunpack.c.l.b16 %v2311
    %v2344 = vunpack.c.l.b16 %v2312
    %v2345 = vpack.c.b16 %v2330, %v2329
    %v2346 = vpack.c.b16 %v2332, %v2331
    %v2347 = vpack.c.b16 %v2334, %v2333
    %v2348 = vpack.c.b16 %v2336, %v2335
    %v2349 = vpack.c.b16 %v2338, %v2337
    %v2350 = vpack.c.b16 %v2340, %v2339
    %v2351 = vpack.c.b16 %v2342, %v2341
    %v2352 = vpack.c.b16 %v2344, %v2343
    %2361 = vmatprep.subr.bf16.mxu0 0
    %2362 = vmatpush1.bf16.msra.mxu0 %v2345
    %2363 = vmatprep.subr.bf16.mxu0 0
    %2364 = vmatpush1.bf16.msra.mxu0 %v2346
    %2365 = vmatprep.subr.bf16.mxu0 0
    %2366 = vmatpush1.bf16.msra.mxu0 %v2347
    %2367 = vmatprep.subr.bf16.mxu0 0
    %2368 = vmatpush1.bf16.msra.mxu0 %v2348
    %2369 = vmatprep.subr.bf16.mxu0 0
    %2370 = vmatpush1.bf16.msra.mxu0 %v2349
    %2371 = vmatprep.subr.bf16.mxu0 0
    %2372 = vmatpush1.bf16.msra.mxu0 %v2350
    %2373 = vmatprep.subr.bf16.mxu0 0
    %2374 = vmatpush1.bf16.msra.mxu0 %v2351
    %2375 = vmatprep.subr.bf16.mxu0 0
    %2376 = vmatpush1.bf16.msra.mxu0 %v2352
    %2377 = vmatprep.subr.bf16.mxu0 0
    %2378 = vmatpush1.bf16.msra.mxu0 0
    %2379 = vmatprep.subr.bf16.mxu0 0
    %2380 = vmatpush1.bf16.msra.mxu0 0
    %2381 = vmatprep.subr.bf16.mxu0 0
    %2382 = vmatpush1.bf16.msra.mxu0 0
    %2383 = vmatprep.subr.bf16.mxu0 0
    %2384 = vmatpush1.bf16.msra.mxu0 0
    %2385 = vmatprep.subr.bf16.mxu0 0
    %2386 = vmatpush1.bf16.msra.mxu0 0
    %2387 = vmatprep.subr.bf16.mxu0 0
    %2388 = vmatpush1.bf16.msra.mxu0 0
    %2389 = vmatprep.subr.bf16.mxu0 0
    %2390 = vmatpush1.bf16.msra.mxu0 0
    %2391 = vmatprep.subr.bf16.mxu0 0
    %2392 = vmatpush1.bf16.msra.mxu0 0
    %2393 = vmatprep.mubr.bf16.mxu0 0
    %2394 = vmatmul.mubr.bf16.gmra.mrb[0].mxu0 %v2296
    %v2395 = vpop.f32.mrb[0].mxu0
    %v2396 = vadd.f32 0.0, %v2395
    %v2397 = vpop.f32.mrb[0].mxu0
    %v2398 = vpop.f32.mrb[0].mxu0
    %v2399 = vpop.f32.mrb[0].mxu0
    %2400 = vdwg.mxu0
    %v2401 = vadd.f32 %v2280, %v2396
    %v2402 = vlaneseq
    %v2403 = vshrl.u32 %v2402, 7
    %v2404 = vsub.s32 6, %v2403
    %v2405 = vrot.slane %v16, %v2404
    %v2406 = vadd.f32 %v2401, %v2405
    %vm2407 = vcmp.gt.f32.partialorder %v2406, 0.0
    %v2408 = vmul.f32 %v2406, 0.01
    %v2409 = vsel %vm2407, %v2406, %v2408
    %v2410 = vsel %vm62, %v2409, 0.0
    %v2411 = vrot.slane %v2410, 4
    %v2412 = vadd.f32 %v2410, %v2411
    %v2413 = vrot.slane %v2412, 2
    %v2414 = vadd.f32 %v2412, %v2413
    %v2415 = vrot.slane %v2414, 1
    %v2416 = vadd.f32 %v2414, %v2415
    %v2417 = vrcp.pop 8.0
    %v2418 = vmul.f32 %v2416, %v2417
    %v2419 = vsub.f32 %v2409, %v2418
    %v2420 = vmul.f32 %v2419, %v2419
    %v2421 = vsel %vm62, %v2420, 0.0
    %v2422 = vrot.slane %v2421, 4
    %v2423 = vadd.f32 %v2421, %v2422
    %v2424 = vrot.slane %v2423, 2
    %v2425 = vadd.f32 %v2423, %v2424
    %v2426 = vrot.slane %v2425, 1
    %v2427 = vadd.f32 %v2425, %v2426
    %v2428 = vmul.f32 %v2427, %v2417
    %v2429 = vadd.f32 %v2428, 1e-05
    %v2430 = vrsqrt.pop %v2429
    %v2431 = vmul.f32 %v2419, %v2430
    %v2432 = vlaneseq
    %v2433 = vshrl.u32 %v2432, 7
    %v2434 = vsub.s32 7, %v2433
    %v2435 = vrot.slane %v16, %v2434
    %v2436 = vmul.f32 %v2431, %v2435
    %v2437 = vlaneseq
    %v2438 = vshrl.u32 %v2437, 7
    %v2439 = vsub.s32 0, %v2438
    %v2440 = vrot.slane %v17, %v2439
    %v2441 = vadd.f32 %v2436, %v2440
    %2442 = vst.msk [vmem:[#allocation2] sm:$0xff] %vm62, %v2441
    // Predicated region
    $region14: #{cnn_forward.1} parent=1 // pred_check
      _
    $region15: #{cnn_forward.1} parent=1 // pred_check_branch
      %2444 = sbr.rel (0) target = $region17
    $region16: #{cnn_forward.1} parent=1 // pred_region
      %s2446 = ssub.s32 128, 128
      %2447 = vsyncadd [#allocation3], %s2446
      %s2449 = sshll.u32 [#allocation2], 4
      %s2450 = int_to_ptr.vmem [resolvable:$true] %s2449
      %2452 = dma.vmem_to_hbm [thread:$0]  %s2450, 128, %s3, [#allocation3]
    $region17: #{cnn_forward.1} parent=1 // pred_fallthru
      _
    // Predicated region
    $region18: #{cnn_forward.1} parent=1 // pred_check
      _
    $region19: #{cnn_forward.1} parent=1 // pred_check_branch
      %2454 = sbr.rel (0) target = $region21
    $region20: #{cnn_forward.1} parent=1 // pred_region
      %2455 = dma.done [#allocation3], 128
    $region21: #{cnn_forward.1} parent=1 // pred_fallthru
      _
    %2456 = vsyncpa [#allocation3], 1

</llo_original>
